<compile_context>
chip_gen: v7x
topology: tpu7x:2x2x1
jax: 0.10.0
libtpu: 0.0.40
codegen_flags: <defaults>
</compile_context>

<pallas_src>
import math
from functools import partial

import jax
import jax.numpy as jnp
from jax.experimental import pallas as pl
from jax.experimental.pallas import tpu as pltpu


def _round_up(x, m):
    return ((x + m - 1) // m) * m


def _vmem_capacity_bytes():
    """Best-effort physical VMEM size of the current TPU generation."""
    try:
        info = pltpu.get_tpu_info()
        for name in ("vmem_capacity_bytes", "vmem_size_bytes", "vmem_bytes"):
            cap = getattr(info, name, None)
            if cap:
                return int(cap)
    except Exception:
        pass
    return 64 << 20  # conservative default (v7x per-TensorCore)


def _pick_query_tile(L, num_heads, vmem_cap):
    """Largest 32-aligned query tile dividing L whose live f32 softmax
    temporaries (~4*H*tq*L*4B) fit in a quarter of physical VMEM; falls back to
    the full sequence (a full-dim block is always legal)."""
    budget = vmem_cap // 4
    divisors = [t for t in (512, 256, 128, 64, 32) if L % t == 0]
    for t in divisors:
        if 4 * num_heads * t * L * 4 <= budget:
            return t
    if divisors:
        return divisors[-1]
    return L


def _self_attention_kernel(x_ref, wqkv_ref, bqkv_ref, mask_ref, out_ref,
                           q_scr, k_scr, v_scr,
                           *, num_heads, dk, dv, tq, compute_dtype):
    """One grid step == (batch element b, query tile qi)."""
    qi = pl.program_id(1)
    H = num_heads
    hdk = H * dk
    inv_scale = jnp.float32(1.0 / math.sqrt(dk))
    masked_val = jnp.float32(-10000000000.0 / math.sqrt(dk))  # mask-then-scale fold
    exact_f32 = jnp.dtype(compute_dtype) == jnp.dtype(jnp.float32)

    # ---- fused QKV projection: ONE wide MXU matmul per batch element (qi == 0),
    #      repacked head-major (3*H small stores) into scratch persisting across tiles. ----
    @pl.when(qi == 0)
    def _():
        x = x_ref[0]                                   # (L, E)  already compute_dtype
        w = wqkv_ref[...]                              # (E, 2*hdk + hdv)
        qkv = jnp.dot(x, w, preferred_element_type=jnp.float32) + bqkv_ref[0]  # f32
        q_all = (qkv[:, :hdk] * inv_scale).astype(compute_dtype)   # scale folded into Q
        k_all = qkv[:, hdk:2 * hdk].astype(compute_dtype)
        v_all = qkv[:, 2 * hdk:].astype(compute_dtype)
        for h in range(H):
            q_scr[h] = q_all[:, h * dk:(h + 1) * dk]
            k_scr[h] = k_all[:, h * dk:(h + 1) * dk]
            v_scr[h] = v_all[:, h * dv:(h + 1) * dv]

    # ---- attention for this query tile, all heads batched ----
    q0 = qi * tq
    if tq % 8 == 0:
        q0 = pl.multiple_of(q0, tq)
    q = q_scr[:, pl.ds(q0, tq), :]                     # (H, tq, dk), pre-scaled
    k = k_scr[...]                                     # (H, L, dk)
    v = v_scr[...]                                     # (H, L, dv)

    # Scores: leading-batch einsum contracting dk (no explicit transpose).
    s = jnp.einsum("hqd,hkd->hqk", q, k,
                   preferred_element_type=jnp.float32)  # (H, tq, L) f32

    # masked_fill BEFORE the scale (reference semantics, via the folded constant);
    # single (tq, L) truthiness predicate broadcast over heads.
    masked = mask_ref[...] != 0
    s = jnp.where(masked[None, :, :], masked_val, s)

    # numerically stable softmax with DEFERRED normalization
    m = jnp.max(s, axis=-1, keepdims=True)
    e = jnp.exp(s - m)                                  # (H, tq, L) f32
    l = jnp.sum(e, axis=-1, keepdims=True)              # (H, tq, 1) f32

    o = jnp.einsum("hqk,hkd->hqd", e.astype(compute_dtype), v,
                   preferred_element_type=jnp.float32)  # (H, tq, dv) f32
    o = o * pl.reciprocal(l, approx=not exact_f32)      # normalize the small tensor

    if dv % 128 == 0:
        # 128-aligned heads: direct unmasked per-head slice stores, no relayout.
        for h in range(H):
            out_ref[0, :, h * dv:(h + 1) * dv] = o[h].astype(out_ref.dtype)
    else:
        # concat keeps the store lane-dense when dv < 128.
        out_ref[0] = jnp.concatenate([o[h] for h in range(H)], axis=-1).astype(out_ref.dtype)


def self_attention(x, params, mask=None, *, num_heads, dk, dv,
                   compute_dtype=jnp.bfloat16, query_tile=None):
    """x: (B, L, E) float32.
    params: dict with wq/bq/wk/bk/wv/bv laid out as (E, out) / (1, out).
    mask: optional (L, L) bool/float (truthy == masked).
    compute_dtype: dtype of the MXU matmul operands (bf16 default -- the MXU sweet
                   spot on v5e/v6e/v7x). Masking, scaling, softmax and accumulation
                   are always f32."""
    B, L, E = x.shape
    hdk = num_heads * dk
    hdv = num_heads * dv
    n_qkv = 2 * hdk + hdv
    compute_dtype = jnp.dtype(compute_dtype)
    itemsize = compute_dtype.itemsize

    if mask is None:
        mask = jnp.zeros((L, L), dtype=bool)
    mask_i8 = (mask != 0).astype(jnp.int8)   # truthy == masked; 4x less DMA than f32

    # Fuse the three projections into one lane-dense matmul; pre-cast operands.
    w_qkv = jnp.concatenate([params["wq"], params["wk"], params["wv"]],
                            axis=1).astype(compute_dtype)            # (E, n_qkv)
    b_qkv = jnp.concatenate([params["bq"], params["bk"], params["bv"]],
                            axis=1).astype(jnp.float32)              # (1, n_qkv)
    x_c = x.astype(compute_dtype)

    vmem_cap = _vmem_capacity_bytes()
    tq = query_tile if query_tile is not None else _pick_query_tile(L, num_heads, vmem_cap)
    assert L % tq == 0, "query tile must divide the sequence length"
    nq = L // tq

    kernel = partial(_self_attention_kernel, num_heads=num_heads, dk=dk, dv=dv,
                     tq=tq, compute_dtype=compute_dtype)

    # Advisory cost estimate so XLA schedules surrounding ops around the custom call.
    flops = 2 * B * L * E * n_qkv + 2 * B * num_heads * L * L * (dk + dv)
    cost = pl.CostEstimate(
        flops=int(flops),
        transcendentals=int(B * num_heads * L * L),
        bytes_accessed=int(B * L * E * itemsize + E * n_qkv * itemsize + 4 * n_qkv
                           + B * L * L + 4 * B * L * hdv),
    )

    # VMEM budget: head-major scratch (lane/sublane padded) + double-buffered
    # pipeline blocks; generation-aware clamp (>= computed need, <= ~3/4 physical).
    sub = 8 * 4 // itemsize                       # sublane tile: f32->8, bf16->16
    scr_bytes = (num_heads * _round_up(L, sub)
                 * (2 * _round_up(dk, 128) + _round_up(dv, 128)) * itemsize)
    blk_bytes = 2 * (L * E * itemsize + E * n_qkv * itemsize + 4 * n_qkv
                     + tq * L + 4 * tq * hdv)
    need = scr_bytes + blk_bytes
    vmem_limit = int(min(max(2 * need, 16 << 20), (vmem_cap * 3) // 4))
    vmem_limit = max(vmem_limit, need + (1 << 20))
    vmem_limit = int(min(vmem_limit, vmem_cap))

    return pl.pallas_call(
        kernel,
        out_shape=jax.ShapeDtypeStruct((B, L, hdv), jnp.float32),
        grid_spec=pltpu.PrefetchScalarGridSpec(
            num_scalar_prefetch=0,
            grid=(B, nq),
            in_specs=[
                pl.BlockSpec((1, L, E), lambda b, qi: (b, 0, 0)),   # x: full sequence per batch elem
                pl.BlockSpec((E, n_qkv), lambda b, qi: (0, 0)),     # fused W_qkv (grid-invariant)
                pl.BlockSpec((1, n_qkv), lambda b, qi: (0, 0)),     # fused b_qkv (grid-invariant)
                pl.BlockSpec((tq, L), lambda b, qi: (qi, 0)),       # int8 mask rows for this tile
            ],
            out_specs=pl.BlockSpec((1, tq, hdv), lambda b, qi: (b, qi, 0)),
            scratch_shapes=[
                pltpu.VMEM((num_heads, L, dk), compute_dtype),      # Q (head-major, pre-scaled)
                pltpu.VMEM((num_heads, L, dk), compute_dtype),      # K (head-major)
                pltpu.VMEM((num_heads, L, dv), compute_dtype),      # V (head-major)
            ],
        ),
        compiler_params=pltpu.CompilerParams(
            dimension_semantics=("parallel", "arbitrary"),
            vmem_limit_bytes=vmem_limit,
        ),
        cost_estimate=cost,
    )(x_c, w_qkv, b_qkv, mask_i8)


def init_params(key, embedding_dim, dk, dv, num_heads):
    """Deterministic init mimicking torch.nn.Linear (uniform +-1/sqrt(fan_in)).
    Weights stored transposed as (in, out) so the kernel does x @ W + b."""
    bound = 1.0 / math.sqrt(embedding_dim)
    keys = jax.random.split(key, 6)
    shp_qk = (embedding_dim, dk * num_heads)
    shp_v = (embedding_dim, dv * num_heads)
    u = lambda k, s: jax.random.uniform(k, s, jnp.float32, -bound, bound)
    return {
        "wq": u(keys[0], shp_qk), "bq": u(keys[1], (1, dk * num_heads)),
        "wk": u(keys[2], shp_qk), "bk": u(keys[3], (1, dk * num_heads)),
        "wv": u(keys[4], shp_v),  "bv": u(keys[5], (1, dv * num_heads)),
    }


def self_attention_ref(x, params, mask, *, num_heads, dk, dv):
    """Pure-JAX reference mirroring the PyTorch module."""
    B, L, E = x.shape
    q = x @ params["wq"] + params["bq"][0]
    k = x @ params["wk"] + params["bk"][0]
    v = x @ params["wv"] + params["bv"][0]
    q = q.reshape(B, L, num_heads, dk).transpose(0, 2, 1, 3)
    k = k.reshape(B, L, num_heads, dk).transpose(0, 2, 1, 3)
    v = v.reshape(B, L, num_heads, dv).transpose(0, 2, 1, 3)
    s = jnp.einsum("bhqd,bhkd->bhqk", q, k)
    s = jnp.where(mask[None, None], -10000000000.0, s) / math.sqrt(dk)
    p = jax.nn.softmax(s, axis=-1)
    o = jnp.einsum("bhqk,bhkd->bhqd", p, v)
    return o.transpose(0, 2, 1, 3).reshape(B, L, num_heads * dv)


if __name__ == "__main__":
    B, L, E = 2, 8, 32
    num_heads, dk, dv = 4, 8, 8

    key = jax.random.PRNGKey(0)
    kx, kp, kx2 = jax.random.split(key, 3)
    x = jax.random.normal(kx, (B, L, E), dtype=jnp.float32)
    params = init_params(kp, E, dk, dv, num_heads)

    # 1) default (all-zero) mask, f32 compute -- must match the reference tightly.
    mask = jnp.zeros((L, L), dtype=bool)
    out = self_attention(x, params, mask, num_heads=num_heads, dk=dk, dv=dv,
                         compute_dtype=jnp.float32)
    out = jax.block_until_ready(out)
    ref = self_attention_ref(x, params, mask, num_heads=num_heads, dk=dk, dv=dv)
    assert out.shape == (B, L, num_heads * dv)
    assert jnp.allclose(out, ref, atol=1e-4, rtol=1e-4), "f32 kernel mismatch vs JAX reference"

    # 2) non-trivial (causal) mask, f32 -- exercises the masked_fill path.
    causal = jnp.triu(jnp.ones((L, L), dtype=bool), k=1)
    out_c = jax.block_until_ready(
        self_attention(x, params, causal, num_heads=num_heads, dk=dk, dv=dv,
                       compute_dtype=jnp.float32))
    ref_c = self_attention_ref(x, params, causal, num_heads=num_heads, dk=dk, dv=dv)
    assert jnp.allclose(out_c, ref_c, atol=1e-4, rtol=1e-4), "masked kernel mismatch vs reference"

    # 3) default bf16-operand / f32-accumulate path (MXU operating point) -- loose check.
    out_bf16 = jax.block_until_ready(
        self_attention(x, params, mask, num_heads=num_heads, dk=dk, dv=dv))
    assert out_bf16.shape == (B, L, num_heads * dv)
    assert bool(jnp.all(jnp.isfinite(out_bf16)))
    assert float(jnp.max(jnp.abs(out_bf16 - ref))) < 5e-2, "bf16 variant drifted too far"

    # 4) multi-tile query path (nq > 1): longer sequence with a forced 32-row tile,
    #    f32 compute, causal mask -- exercises scratch reuse + pl.ds query slicing.
    L2 = 64
    x2 = jax.random.normal(kx2, (B, L2, E), dtype=jnp.float32)
    causal2 = jnp.triu(jnp.ones((L2, L2), dtype=bool), k=1)
    out2 = jax.block_until_ready(
        self_attention(x2, params, causal2, num_heads=num_heads, dk=dk, dv=dv,
                       compute_dtype=jnp.float32, query_tile=32))
    ref2 = self_attention_ref(x2, params, causal2, num_heads=num_heads, dk=dk, dv=dv)
    assert jnp.allclose(out2, ref2, atol=1e-4, rtol=1e-4), "multi-tile kernel mismatch vs reference"

    print("KERNEL_OK")
</pallas_src>

<mosaic_0001>
module attributes {stable_mosaic.version = 11 : i64} {
  func.func @_self_attention_kernel(%arg0: i32, %arg1: i32, %arg2: memref<1x8x32xf32, #tpu.memory_space<vmem>>, %arg3: memref<32x96xf32, #tpu.memory_space<vmem>>, %arg4: memref<1x96xf32, #tpu.memory_space<vmem>>, %arg5: memref<8x8xi8, #tpu.memory_space<vmem>>, %arg6: memref<1x8x32xf32, #tpu.memory_space<vmem>>, %arg7: memref<4x8x8xf32, #tpu.memory_space<vmem>>, %arg8: memref<4x8x8xf32, #tpu.memory_space<vmem>>, %arg9: memref<4x8x8xf32, #tpu.memory_space<vmem>>) attributes {dimension_semantics = [#tpu.dimension_semantics<parallel>, #tpu.dimension_semantics<arbitrary>], iteration_bounds = array<i64: 2, 1>, scalar_prefetch = 0 : i64, scratch_operands = 3 : i64, tpu.core_type = #tpu.core_type<tc>, window_params = [{transform_indices = @transform_0, window_bounds = array<i64: 1, 8, 32>}, {pipeline_mode = #tpu.pipeline_mode<synchronous>, transform_indices = @transform_1, window_bounds = array<i64: 32, 96>}, {pipeline_mode = #tpu.pipeline_mode<synchronous>, transform_indices = @transform_2, window_bounds = array<i64: 1, 96>}, {transform_indices = @transform_3, window_bounds = array<i64: 8, 8>}, {transform_indices = @transform_4, window_bounds = array<i64: 1, 8, 32>}]} {
    %c0_i32 = arith.constant 0 : i32
    %0 = arith.cmpi eq, %arg1, %c0_i32 : i32
    %1 = arith.extui %0 : i1 to i32
    %cst = arith.constant 0.353553385 : f32
    %c0_i32_0 = arith.constant 0 : i32
    %2 = arith.cmpi ne, %1, %c0_i32_0 : i32
    scf.if %2 {
      %c0_18 = arith.constant 0 : index
      %c0_19 = arith.constant 0 : index
      %c0_20 = arith.constant 0 : index
      %41 = vector.load %arg2[%c0_18, %c0_19, %c0_20] : memref<1x8x32xf32, #tpu.memory_space<vmem>>, vector<1x8x32xf32>
      %42 = vector.shape_cast %41 : vector<1x8x32xf32> to vector<8x32xf32>
      %c0_21 = arith.constant 0 : index
      %c0_22 = arith.constant 0 : index
      %43 = vector.load %arg3[%c0_21, %c0_22] : memref<32x96xf32, #tpu.memory_space<vmem>>, vector<32x96xf32>
      %cst_23 = arith.constant dense<0.000000e+00> : vector<8x96xf32>
      %44 = tpu.matmul %42, %43, %cst_23 {dimension_numbers = #tpu.dot_dimension_numbers<[1], [0], [0], [1], [0, 0, 1, 1], [], []>} : vector<8x32xf32>, vector<32x96xf32>, vector<8x96xf32> -> vector<8x96xf32>
      %c0_24 = arith.constant 0 : index
      %c0_25 = arith.constant 0 : index
      %45 = vector.load %arg4[%c0_24, %c0_25] : memref<1x96xf32, #tpu.memory_space<vmem>>, vector<1x96xf32>
      %46 = vector.shape_cast %45 : vector<1x96xf32> to vector<96xf32>
      %47 = vector.shape_cast %46 : vector<96xf32> to vector<1x96xf32>
      %48 = vector.broadcast %47 : vector<1x96xf32> to vector<8x96xf32>
      %49 = arith.addf %44, %48 : vector<8x96xf32>
      %50 = vector.extract_strided_slice %49 {offsets = [0, 0], sizes = [8, 32], strides = [1, 1]} : vector<8x96xf32> to vector<8x32xf32>
      %51 = vector.broadcast %cst : f32 to vector<8x32xf32>
      %52 = arith.mulf %50, %51 : vector<8x32xf32>
      %53 = vector.extract_strided_slice %49 {offsets = [0, 32], sizes = [8, 32], strides = [1, 1]} : vector<8x96xf32> to vector<8x32xf32>
      %54 = vector.extract_strided_slice %49 {offsets = [0, 64], sizes = [8, 32], strides = [1, 1]} : vector<8x96xf32> to vector<8x32xf32>
      %55 = vector.extract_strided_slice %52 {offsets = [0, 0], sizes = [8, 8], strides = [1, 1]} : vector<8x32xf32> to vector<8x8xf32>
      %c0_26 = arith.constant 0 : index
      %c0_27 = arith.constant 0 : index
      %c0_28 = arith.constant 0 : index
      %56 = vector.load %arg7[%c0_26, %c0_27, %c0_28] : memref<4x8x8xf32, #tpu.memory_space<vmem>>, vector<1x8x8xf32>
      %57 = vector.shape_cast %56 : vector<1x8x8xf32> to vector<8x8xf32>
      %58 = vector.shape_cast %55 : vector<8x8xf32> to vector<1x8x8xf32>
      tpu.vector_store %arg7[%c0_26, %c0_27, %c0_28], %58 {strides = array<i32>} : memref<4x8x8xf32, #tpu.memory_space<vmem>>, vector<1x8x8xf32>,
      %59 = vector.extract_strided_slice %53 {offsets = [0, 0], sizes = [8, 8], strides = [1, 1]} : vector<8x32xf32> to vector<8x8xf32>
      %c0_29 = arith.constant 0 : index
      %c0_30 = arith.constant 0 : index
      %c0_31 = arith.constant 0 : index
      %60 = vector.load %arg8[%c0_29, %c0_30, %c0_31] : memref<4x8x8xf32, #tpu.memory_space<vmem>>, vector<1x8x8xf32>
      %61 = vector.shape_cast %60 : vector<1x8x8xf32> to vector<8x8xf32>
      %62 = vector.shape_cast %59 : vector<8x8xf32> to vector<1x8x8xf32>
      tpu.vector_store %arg8[%c0_29, %c0_30, %c0_31], %62 {strides = array<i32>} : memref<4x8x8xf32, #tpu.memory_space<vmem>>, vector<1x8x8xf32>,
      %63 = vector.extract_strided_slice %54 {offsets = [0, 0], sizes = [8, 8], strides = [1, 1]} : vector<8x32xf32> to vector<8x8xf32>
      %c0_32 = arith.constant 0 : index
      %c0_33 = arith.constant 0 : index
      %c0_34 = arith.constant 0 : index
      %64 = vector.load %arg9[%c0_32, %c0_33, %c0_34] : memref<4x8x8xf32, #tpu.memory_space<vmem>>, vector<1x8x8xf32>
      %65 = vector.shape_cast %64 : vector<1x8x8xf32> to vector<8x8xf32>
      %66 = vector.shape_cast %63 : vector<8x8xf32> to vector<1x8x8xf32>
      tpu.vector_store %arg9[%c0_32, %c0_33, %c0_34], %66 {strides = array<i32>} : memref<4x8x8xf32, #tpu.memory_space<vmem>>, vector<1x8x8xf32>,
      %67 = vector.extract_strided_slice %52 {offsets = [0, 8], sizes = [8, 8], strides = [1, 1]} : vector<8x32xf32> to vector<8x8xf32>
      %c1 = arith.constant 1 : index
      %c0_35 = arith.constant 0 : index
      %c0_36 = arith.constant 0 : index
      %68 = vector.load %arg7[%c1, %c0_35, %c0_36] : memref<4x8x8xf32, #tpu.memory_space<vmem>>, vector<1x8x8xf32>
      %69 = vector.shape_cast %68 : vector<1x8x8xf32> to vector<8x8xf32>
      %70 = vector.shape_cast %67 : vector<8x8xf32> to vector<1x8x8xf32>
      tpu.vector_store %arg7[%c1, %c0_35, %c0_36], %70 {strides = array<i32>} : memref<4x8x8xf32, #tpu.memory_space<vmem>>, vector<1x8x8xf32>,
      %71 = vector.extract_strided_slice %53 {offsets = [0, 8], sizes = [8, 8], strides = [1, 1]} : vector<8x32xf32> to vector<8x8xf32>
      %c1_37 = arith.constant 1 : index
      %c0_38 = arith.constant 0 : index
      %c0_39 = arith.constant 0 : index
      %72 = vector.load %arg8[%c1_37, %c0_38, %c0_39] : memref<4x8x8xf32, #tpu.memory_space<vmem>>, vector<1x8x8xf32>
      %73 = vector.shape_cast %72 : vector<1x8x8xf32> to vector<8x8xf32>
      %74 = vector.shape_cast %71 : vector<8x8xf32> to vector<1x8x8xf32>
      tpu.vector_store %arg8[%c1_37, %c0_38, %c0_39], %74 {strides = array<i32>} : memref<4x8x8xf32, #tpu.memory_space<vmem>>, vector<1x8x8xf32>,
      %75 = vector.extract_strided_slice %54 {offsets = [0, 8], sizes = [8, 8], strides = [1, 1]} : vector<8x32xf32> to vector<8x8xf32>
      %c1_40 = arith.constant 1 : index
      %c0_41 = arith.constant 0 : index
      %c0_42 = arith.constant 0 : index
      %76 = vector.load %arg9[%c1_40, %c0_41, %c0_42] : memref<4x8x8xf32, #tpu.memory_space<vmem>>, vector<1x8x8xf32>
      %77 = vector.shape_cast %76 : vector<1x8x8xf32> to vector<8x8xf32>
      %78 = vector.shape_cast %75 : vector<8x8xf32> to vector<1x8x8xf32>
      tpu.vector_store %arg9[%c1_40, %c0_41, %c0_42], %78 {strides = array<i32>} : memref<4x8x8xf32, #tpu.memory_space<vmem>>, vector<1x8x8xf32>,
      %79 = vector.extract_strided_slice %52 {offsets = [0, 16], sizes = [8, 8], strides = [1, 1]} : vector<8x32xf32> to vector<8x8xf32>
      %c2 = arith.constant 2 : index
      %c0_43 = arith.constant 0 : index
      %c0_44 = arith.constant 0 : index
      %80 = vector.load %arg7[%c2, %c0_43, %c0_44] : memref<4x8x8xf32, #tpu.memory_space<vmem>>, vector<1x8x8xf32>
      %81 = vector.shape_cast %80 : vector<1x8x8xf32> to vector<8x8xf32>
      %82 = vector.shape_cast %79 : vector<8x8xf32> to vector<1x8x8xf32>
      tpu.vector_store %arg7[%c2, %c0_43, %c0_44], %82 {strides = array<i32>} : memref<4x8x8xf32, #tpu.memory_space<vmem>>, vector<1x8x8xf32>,
      %83 = vector.extract_strided_slice %53 {offsets = [0, 16], sizes = [8, 8], strides = [1, 1]} : vector<8x32xf32> to vector<8x8xf32>
      %c2_45 = arith.constant 2 : index
      %c0_46 = arith.constant 0 : index
      %c0_47 = arith.constant 0 : index
      %84 = vector.load %arg8[%c2_45, %c0_46, %c0_47] : memref<4x8x8xf32, #tpu.memory_space<vmem>>, vector<1x8x8xf32>
      %85 = vector.shape_cast %84 : vector<1x8x8xf32> to vector<8x8xf32>
      %86 = vector.shape_cast %83 : vector<8x8xf32> to vector<1x8x8xf32>
      tpu.vector_store %arg8[%c2_45, %c0_46, %c0_47], %86 {strides = array<i32>} : memref<4x8x8xf32, #tpu.memory_space<vmem>>, vector<1x8x8xf32>,
      %87 = vector.extract_strided_slice %54 {offsets = [0, 16], sizes = [8, 8], strides = [1, 1]} : vector<8x32xf32> to vector<8x8xf32>
      %c2_48 = arith.constant 2 : index
      %c0_49 = arith.constant 0 : index
      %c0_50 = arith.constant 0 : index
      %88 = vector.load %arg9[%c2_48, %c0_49, %c0_50] : memref<4x8x8xf32, #tpu.memory_space<vmem>>, vector<1x8x8xf32>
      %89 = vector.shape_cast %88 : vector<1x8x8xf32> to vector<8x8xf32>
      %90 = vector.shape_cast %87 : vector<8x8xf32> to vector<1x8x8xf32>
      tpu.vector_store %arg9[%c2_48, %c0_49, %c0_50], %90 {strides = array<i32>} : memref<4x8x8xf32, #tpu.memory_space<vmem>>, vector<1x8x8xf32>,
      %91 = vector.extract_strided_slice %52 {offsets = [0, 24], sizes = [8, 8], strides = [1, 1]} : vector<8x32xf32> to vector<8x8xf32>
      %c3 = arith.constant 3 : index
      %c0_51 = arith.constant 0 : index
      %c0_52 = arith.constant 0 : index
      %92 = vector.load %arg7[%c3, %c0_51, %c0_52] : memref<4x8x8xf32, #tpu.memory_space<vmem>>, vector<1x8x8xf32>
      %93 = vector.shape_cast %92 : vector<1x8x8xf32> to vector<8x8xf32>
      %94 = vector.shape_cast %91 : vector<8x8xf32> to vector<1x8x8xf32>
      tpu.vector_store %arg7[%c3, %c0_51, %c0_52], %94 {strides = array<i32>} : memref<4x8x8xf32, #tpu.memory_space<vmem>>, vector<1x8x8xf32>,
      %95 = vector.extract_strided_slice %53 {offsets = [0, 24], sizes = [8, 8], strides = [1, 1]} : vector<8x32xf32> to vector<8x8xf32>
      %c3_53 = arith.constant 3 : index
      %c0_54 = arith.constant 0 : index
      %c0_55 = arith.constant 0 : index
      %96 = vector.load %arg8[%c3_53, %c0_54, %c0_55] : memref<4x8x8xf32, #tpu.memory_space<vmem>>, vector<1x8x8xf32>
      %97 = vector.shape_cast %96 : vector<1x8x8xf32> to vector<8x8xf32>
      %98 = vector.shape_cast %95 : vector<8x8xf32> to vector<1x8x8xf32>
      tpu.vector_store %arg8[%c3_53, %c0_54, %c0_55], %98 {strides = array<i32>} : memref<4x8x8xf32, #tpu.memory_space<vmem>>, vector<1x8x8xf32>,
      %99 = vector.extract_strided_slice %54 {offsets = [0, 24], sizes = [8, 8], strides = [1, 1]} : vector<8x32xf32> to vector<8x8xf32>
      %c3_56 = arith.constant 3 : index
      %c0_57 = arith.constant 0 : index
      %c0_58 = arith.constant 0 : index
      %100 = vector.load %arg9[%c3_56, %c0_57, %c0_58] : memref<4x8x8xf32, #tpu.memory_space<vmem>>, vector<1x8x8xf32>
      %101 = vector.shape_cast %100 : vector<1x8x8xf32> to vector<8x8xf32>
      %102 = vector.shape_cast %99 : vector<8x8xf32> to vector<1x8x8xf32>
      tpu.vector_store %arg9[%c3_56, %c0_57, %c0_58], %102 {strides = array<i32>} : memref<4x8x8xf32, #tpu.memory_space<vmem>>, vector<1x8x8xf32>,
    } else {
    }
    %c8_i32 = arith.constant 8 : i32
    %3 = arith.muli %arg1, %c8_i32 : i32
    %4 = tpu.assume_multiple %3, 8 : i32
    %c0 = arith.constant 0 : index
    %5 = arith.index_cast %4 : i32 to index
    %c0_1 = arith.constant 0 : index
    %6 = vector.load %arg7[%c0, %5, %c0_1] : memref<4x8x8xf32, #tpu.memory_space<vmem>>, vector<4x8x8xf32>
    %c0_2 = arith.constant 0 : index
    %c0_3 = arith.constant 0 : index
    %c0_4 = arith.constant 0 : index
    %7 = vector.load %arg8[%c0_2, %c0_3, %c0_4] : memref<4x8x8xf32, #tpu.memory_space<vmem>>, vector<4x8x8xf32>
    %c0_5 = arith.constant 0 : index
    %c0_6 = arith.constant 0 : index
    %c0_7 = arith.constant 0 : index
    %8 = vector.load %arg9[%c0_5, %c0_6, %c0_7] : memref<4x8x8xf32, #tpu.memory_space<vmem>>, vector<4x8x8xf32>
    "tpu.trace_start"() <{level = 10 : i32, message = "hqd,hkd->hqk"}> : () -> ()
    %cst_8 = arith.constant dense<0.000000e+00> : vector<4x8x8xf32>
    %9 = tpu.matmul %6, %7, %cst_8 {dimension_numbers = #tpu.dot_dimension_numbers<[2], [2], [1], [1], [0, 0, 0, 1, 1, 1], [0], [0]>} : vector<4x8x8xf32>, vector<4x8x8xf32>, vector<4x8x8xf32> -> vector<4x8x8xf32>
    "tpu.trace_stop"() : () -> ()
    %c0_9 = arith.constant 0 : index
    %c0_10 = arith.constant 0 : index
    %10 = vector.load %arg5[%c0_9, %c0_10] : memref<8x8xi8, #tpu.memory_space<vmem>>, vector<8x8xi8>
    %c0_i8 = arith.constant 0 : i8
    %11 = vector.broadcast %c0_i8 : i8 to vector<8x8xi8>
    %12 = arith.cmpi ne, %10, %11 : vector<8x8xi8>
    %13 = vector.shape_cast %12 : vector<8x8xi1> to vector<1x8x8xi1>
    %cst_11 = arith.constant -3.53553382E+9 : f32
    %14 = vector.shape_cast %13 : vector<1x8x8xi1> to vector<1x8x8xi1>
    %15 = vector.broadcast %14 : vector<1x8x8xi1> to vector<4x8x8xi1>
    %16 = vector.broadcast %cst_11 : f32 to vector<4x8x8xf32>
    %17 = arith.select %15, %16, %9 : vector<4x8x8xi1>, vector<4x8x8xf32>
    %cst_12 = arith.constant dense<0xFF800000> : vector<4x8xf32>
    %18 = vector.multi_reduction <maximumf>, %17, %cst_12 [2] : vector<4x8x8xf32> to vector<4x8xf32>
    %19 = vector.shape_cast %18 : vector<4x8xf32> to vector<4x8x1xf32>
    %20 = vector.broadcast %19 : vector<4x8x1xf32> to vector<4x8x8xf32>
    %21 = arith.subf %17, %20 : vector<4x8x8xf32>
    %22 = math.exp %21 : vector<4x8x8xf32>
    %cst_13 = arith.constant dense<0.000000e+00> : vector<4x8xf32>
    %23 = vector.multi_reduction <add>, %22, %cst_13 [2] : vector<4x8x8xf32> to vector<4x8xf32>
    %24 = vector.shape_cast %23 : vector<4x8xf32> to vector<4x8x1xf32>
    "tpu.trace_start"() <{level = 10 : i32, message = "hqk,hkd->hqd"}> : () -> ()
    %cst_14 = arith.constant dense<0.000000e+00> : vector<4x8x8xf32>
    %25 = tpu.matmul %22, %8, %cst_14 {dimension_numbers = #tpu.dot_dimension_numbers<[2], [1], [1], [2], [0, 0, 0, 1, 1, 2], [0], [0]>} : vector<4x8x8xf32>, vector<4x8x8xf32>, vector<4x8x8xf32> -> vector<4x8x8xf32>
    "tpu.trace_stop"() : () -> ()
    %26 = tpu.reciprocal %24 : vector<4x8x1xf32> -> vector<4x8x1xf32>
    %27 = vector.broadcast %26 : vector<4x8x1xf32> to vector<4x8x8xf32>
    %28 = arith.mulf %25, %27 : vector<4x8x8xf32>
    %29 = vector.extract_strided_slice %28 {offsets = [0, 0, 0], sizes = [1, 8, 8], strides = [1, 1, 1]} : vector<4x8x8xf32> to vector<1x8x8xf32>
    %30 = vector.shape_cast %29 : vector<1x8x8xf32> to vector<8x8xf32>
    %31 = vector.extract_strided_slice %28 {offsets = [1, 0, 0], sizes = [1, 8, 8], strides = [1, 1, 1]} : vector<4x8x8xf32> to vector<1x8x8xf32>
    %32 = vector.shape_cast %31 : vector<1x8x8xf32> to vector<8x8xf32>
    %33 = vector.extract_strided_slice %28 {offsets = [2, 0, 0], sizes = [1, 8, 8], strides = [1, 1, 1]} : vector<4x8x8xf32> to vector<1x8x8xf32>
    %34 = vector.shape_cast %33 : vector<1x8x8xf32> to vector<8x8xf32>
    %35 = vector.extract_strided_slice %28 {offsets = [3, 0, 0], sizes = [1, 8, 8], strides = [1, 1, 1]} : vector<4x8x8xf32> to vector<1x8x8xf32>
    %36 = vector.shape_cast %35 : vector<1x8x8xf32> to vector<8x8xf32>
    %37 = tpu.concatenate %30, %32, %34, %36 in 1 : vector<8x8xf32>, vector<8x8xf32>, vector<8x8xf32>, vector<8x8xf32> -> vector<8x32xf32>
    %c0_15 = arith.constant 0 : index
    %c0_16 = arith.constant 0 : index
    %c0_17 = arith.constant 0 : index
    %38 = vector.load %arg6[%c0_15, %c0_16, %c0_17] : memref<1x8x32xf32, #tpu.memory_space<vmem>>, vector<1x8x32xf32>
    %39 = vector.shape_cast %38 : vector<1x8x32xf32> to vector<8x32xf32>
    %40 = vector.shape_cast %37 : vector<8x32xf32> to vector<1x8x32xf32>
    tpu.vector_store %arg6[%c0_15, %c0_16, %c0_17], %40 {strides = array<i32>} : memref<1x8x32xf32, #tpu.memory_space<vmem>>, vector<1x8x32xf32>,
    return
  }
  func.func @transform_0(%arg0: i32, %arg1: i32) -> (i32, i32, i32) {
    %c0_i32 = arith.constant 0 : i32
    %c0_i32_0 = arith.constant 0 : i32
    %c0_i32_1 = arith.constant 0 : i32
    return %arg0, %c0_i32, %c0_i32_0 : i32, i32, i32
  }
  func.func @transform_1(%arg0: i32, %arg1: i32) -> (i32, i32) {
    %c0_i32 = arith.constant 0 : i32
    %c0_i32_0 = arith.constant 0 : i32
    %c0_i32_1 = arith.constant 0 : i32
    return %c0_i32, %c0_i32_0 : i32, i32
  }
  func.func @transform_2(%arg0: i32, %arg1: i32) -> (i32, i32) {
    %c0_i32 = arith.constant 0 : i32
    %c0_i32_0 = arith.constant 0 : i32
    %c0_i32_1 = arith.constant 0 : i32
    return %c0_i32, %c0_i32_0 : i32, i32
  }
  func.func @transform_3(%arg0: i32, %arg1: i32) -> (i32, i32) {
    %c0_i32 = arith.constant 0 : i32
    %c0_i32_0 = arith.constant 0 : i32
    return %arg1, %c0_i32 : i32, i32
  }
  func.func @transform_4(%arg0: i32, %arg1: i32) -> (i32, i32, i32) {
    %c0_i32 = arith.constant 0 : i32
    %c0_i32_0 = arith.constant 0 : i32
    return %arg0, %arg1, %c0_i32 : i32, i32, i32
  }
}

</mosaic_0001>

<llo_original>
// kernel: tpu_custom_call.1
$region0: #{tpu_custom_call.1}
  #allocation0 [shape = 'u32[]', space=smem, size = 0x4, offset = 0x4, fixed_abs, tag = 'smem constant byte address 0x4 - core index']
  #allocation1 [shape = 'u32[144,128]{1,0:T(1,128)}', space=vmem, size = 0x12000, scoped, tag = 'internal scratch']
  #allocation2 [shape = 'f32[4,8,8]{2,1,0:T(8,128)}', space=vmem, size = 0x4000, scoped, tag = 'scratch operand']
  #allocation3 [shape = 'f32[4,8,8]{2,1,0:T(8,128)}', space=vmem, size = 0x4000, scoped, tag = 'scratch operand']
  #allocation4 [shape = 'f32[4,8,8]{2,1,0:T(8,128)}', space=vmem, size = 0x4000, scoped, tag = 'scratch operand']
  %s0 = inlined_call_operand.hbm [shape: f32[2,8,32], index: 0, kind: input, shape index: {}]
  %s1 = inlined_call_operand.hbm [shape: f32[32,96], index: 1, kind: input, shape index: {}]
  %s2 = inlined_call_operand.vmem [shape: f32[1,96], index: 2, kind: input, shape index: {}]
  %s3 = inlined_call_operand.vmem [shape: s8[8,8], index: 3, kind: input, shape index: {}]
  %s4 = inlined_call_operand.hbm [shape: f32[2,8,32], index: 4, kind: output, shape index: {}]
  %s5 = sld [smem:[#allocation0]]
  $region61: #{tpu_custom_call.1} parent=0
    _
  %s7 = ssub.s32 1, %s5
  %s8 = scalar_select 0, %s7, %s5
  $region1: #{tpu_custom_call.1} parent=0
    #allocation5 [shape = 'u8[8192]{0}', space=vmem, size = 0x2000, scoped, tag = 'input window, operand 0']
    #allocation6 [shape = 's32[2]{0}', space=sflag, size = 0x8, scoped, tag = 'scoped memory for tpu_custom_call.1']
    #allocation7 [shape = 's32[2]{0}', space=sflag, size = 0x8, scoped, tag = 'scoped memory for tpu_custom_call.1']
    #allocation8 [shape = 'u8[16384]{0}', space=vmem, size = 0x4000, scoped, tag = 'input window, operand 1, single buffered']
    #allocation9 [shape = 's32[1]{0}', space=sflag, size = 0x4, scoped, tag = 'scoped memory for tpu_custom_call.1']
    #allocation10 [shape = 'u8[8192]{0}', space=vmem, size = 0x2000, scoped, tag = 'output window, operand 0']
    %9 = vsyncpa [#allocation6], 0
    %s10 = scalar_lea.sflag [#allocation6], 1
    %11 = vsyncpa %s10, 0
    %12 = vsyncpa [#allocation9], 0
    %13 = vsyncpa [#allocation7], 0
    %s14 = scalar_lea.sflag [#allocation7], 1
    %15 = vsyncpa %s14, 0
    loop: start=0, step=1, limit=4
    $region2: #{tpu_custom_call.1} parent=1 // loop_pre_header
      _
    $region3: #{tpu_custom_call.1} parent=1 // loop_header
      %s17 = sphi 0, %s21
      %p18 = scmp.ge.s32.totalorder %s17, 4
      %s24 = sphi 0, %s36
      %s25 = sphi 0, %s32
      %s26 = sphi 0, %s24
      %s27 = sphi 0, %s25
      %s28 = sphi 0, %s26
      %s29 = sphi 0, %s27
      %s39 = sphi 0, %s41
      %s42 = sphi 0, %s39
      %s43 = sphi 0, %s42
      %s59 = sphi 0, %s43
      %s63 = sphi 0, %s63
      %s65 = sphi 0, %s63
      %s66 = sphi 0, %s65
      %s80 = sphi 0, %s66
      %s84 = sphi 0, %s84
      %s86 = sphi 0, %s84
      %s87 = sphi 0, %s86
      %s101 = sphi 0, %s87
      %s107 = sphi 0, %s109
      %s110 = sphi 0, %s107
      %s111 = sphi 0, %s110
      %s127 = sphi 0, %s111
      %s135 = sphi 0, %s137
      %s138 = sphi 0, %s135
      %s139 = sphi 0, %s138
      %s155 = sphi 0, %s139
    $region4: #{tpu_custom_call.1} parent=1 // loop_header_branch
      %20 = sbr.rel (%p18) target = $region8
    $region5: #{tpu_custom_call.1} parent=1 // loop_body
      %s22 = ssub.s32 %s17, 1
      %s23 = ssub.s32 %s17, 2
      %s30 = sadd.s32 1, %s25
      %p31 = scmp.ge.s32.totalorder %s30, 1
      %s32 = scalar_select %p31, 0, %s30
      %s33 = sadd.s32 1, %s24
      %s34 = scalar_select %p31, %s33, %s24
      %p35 = scmp.ge.s32.totalorder %s34, 2
      %s36 = scalar_select %p35, 0, %s34
      %s37 = ssub.s32 %s24, %s36
      %p38 = scmp.eq.s32.totalorder %s37, 0
      %s40 = sadd.s32 %s39, 1
      %s41 = scalar_select %p38, %s39, %s40
      %p44 = pneg %p38
      %p45 = scmp.eq.s32.totalorder %s17, 1
      %p46 = por %p44, %p45
      %p47 = scmp.ne.s32.totalorder %s39, %s42
      %p48 = scmp.eq.s32.totalorder %s17, 0
      %p49 = por %p47, %p48
      %p50 = scmp.ne.s32.totalorder %s39, %s42
      %p51 = scmp.eq.s32.totalorder %s22, 1
      %p52 = por %p50, %p51
      %p53 = scmp.ne.s32.totalorder %s42, %s43
      %p54 = scmp.eq.s32.totalorder %s22, 0
      %p55 = por %p53, %p54
      %p56 = scmp.ne.s32.totalorder %s42, %s43
      %p57 = scmp.eq.s32.totalorder %s23, 1
      %p58 = por %p56, %p57
      %p60 = scmp.ne.s32.totalorder %s43, %s59
      %p61 = scmp.eq.s32.totalorder %s23, 0
      %p62 = por %p60, %p61
      %s64 = sadd.s32 %s63, 1
      %p67 = scmp.eq.s32.totalorder %s17, 1
      %p68 = scmp.ne.s32.totalorder %s63, %s65
      %p69 = scmp.eq.s32.totalorder %s17, 0
      %p70 = por %p68, %p69
      %p71 = scmp.ne.s32.totalorder %s63, %s65
      %p72 = scmp.eq.s32.totalorder %s22, 1
      %p73 = por %p71, %p72
      %p74 = scmp.ne.s32.totalorder %s65, %s66
      %p75 = scmp.eq.s32.totalorder %s22, 0
      %p76 = por %p74, %p75
      %p77 = scmp.ne.s32.totalorder %s65, %s66
      %p78 = scmp.eq.s32.totalorder %s23, 1
      %p79 = por %p77, %p78
      %p81 = scmp.ne.s32.totalorder %s66, %s80
      %p82 = scmp.eq.s32.totalorder %s23, 0
      %p83 = por %p81, %p82
      %s85 = sadd.s32 %s84, 1
      %p88 = scmp.eq.s32.totalorder %s17, 1
      %p89 = scmp.ne.s32.totalorder %s84, %s86
      %p90 = scmp.eq.s32.totalorder %s17, 0
      %p91 = por %p89, %p90
      %p92 = scmp.ne.s32.totalorder %s84, %s86
      %p93 = scmp.eq.s32.totalorder %s22, 1
      %p94 = por %p92, %p93
      %p95 = scmp.ne.s32.totalorder %s86, %s87
      %p96 = scmp.eq.s32.totalorder %s22, 0
      %p97 = por %p95, %p96
      %p98 = scmp.ne.s32.totalorder %s86, %s87
      %p99 = scmp.eq.s32.totalorder %s23, 1
      %p100 = por %p98, %p99
      %p102 = scmp.ne.s32.totalorder %s87, %s101
      %p103 = scmp.eq.s32.totalorder %s23, 0
      %p104 = por %p102, %p103
      %s105 = ssub.s32 %s25, %s32
      %p106 = scmp.eq.s32.totalorder %s105, 0
      %s108 = sadd.s32 %s107, 1
      %s109 = scalar_select %p106, %s107, %s108
      %p112 = pneg %p106
      %p113 = scmp.eq.s32.totalorder %s17, 1
      %p114 = por %p112, %p113
      %p115 = scmp.ne.s32.totalorder %s107, %s110
      %p116 = scmp.eq.s32.totalorder %s17, 0
      %p117 = por %p115, %p116
      %p118 = scmp.ne.s32.totalorder %s107, %s110
      %p119 = scmp.eq.s32.totalorder %s22, 1
      %p120 = por %p118, %p119
      %p121 = scmp.ne.s32.totalorder %s110, %s111
      %p122 = scmp.eq.s32.totalorder %s22, 0
      %p123 = por %p121, %p122
      %p124 = scmp.ne.s32.totalorder %s110, %s111
      %p125 = scmp.eq.s32.totalorder %s23, 1
      %p126 = por %p124, %p125
      %p128 = scmp.ne.s32.totalorder %s111, %s127
      %p129 = scmp.eq.s32.totalorder %s23, 0
      %p130 = por %p128, %p129
      %s131 = ssub.s32 %s24, %s36
      %s132 = ssub.s32 %s25, %s32
      %s133 = sor.u32 %s131, %s132
      %p134 = scmp.eq.s32.totalorder %s133, 0
      %s136 = sadd.s32 %s135, 1
      %s137 = scalar_select %p134, %s135, %s136
      %p140 = pneg %p134
      %p141 = scmp.eq.s32.totalorder %s17, 1
      %p142 = por %p140, %p141
      %p143 = scmp.ne.s32.totalorder %s135, %s138
      %p144 = scmp.eq.s32.totalorder %s17, 0
      %p145 = por %p143, %p144
      %p146 = scmp.ne.s32.totalorder %s135, %s138
      %p147 = scmp.eq.s32.totalorder %s22, 1
      %p148 = por %p146, %p147
      %p149 = scmp.ne.s32.totalorder %s138, %s139
      %p150 = scmp.eq.s32.totalorder %s22, 0
      %p151 = por %p149, %p150
      %p152 = scmp.ne.s32.totalorder %s138, %s139
      %p153 = scmp.eq.s32.totalorder %s23, 1
      %p154 = por %p152, %p153
      %p156 = scmp.ne.s32.totalorder %s139, %s155
      %p157 = scmp.eq.s32.totalorder %s23, 0
      %p158 = por %p156, %p157
      %p159 = scmp.le.s32.totalorder 1, %s17
      %p160 = scmp.lt.s32.totalorder %s17, 3
      %p161 = pnand %p159, %p160
      %p162 = pneg %p161
      // Predicated region
      $region9: #{tpu_custom_call.1} parent=5 // pred_check
        _
      $region10: #{tpu_custom_call.1} parent=5 // pred_check_branch
        %164 = sbr.rel (%p161) target = $region12
      $region11: #{tpu_custom_call.1} parent=5 // pred_region
        %s165 = ssub.s32 %s17, 1
        // Predicated region
        $region13: #{tpu_custom_call.1} parent=11 // pred_check
          %p166 = pneg %p76
        $region14: #{tpu_custom_call.1} parent=11 // pred_check_branch
          %168 = sbr.rel (%p166) target = $region16
        $region15: #{tpu_custom_call.1} parent=11 // pred_region
          %s170 = ssub.s32 512, 512
          %171 = vsyncadd [#allocation9], %s170
          %s172 = sshll.u32 [#allocation8], 4
          %s173 = int_to_ptr.vmem [resolvable:$true] %s172
          %178 = dma.hbm_to_vmem [thread:$0]  %s1, 512, %s173, [#allocation9], 128, 128, 8
        $region16: #{tpu_custom_call.1} parent=11 // pred_fallthru
          _
        // Predicated region
        $region17: #{tpu_custom_call.1} parent=11 // pred_check
          %p179 = pneg %p97
        $region18: #{tpu_custom_call.1} parent=11 // pred_check_branch
          %181 = sbr.rel (%p179) target = $region20
        $region19: #{tpu_custom_call.1} parent=11 // pred_region
          _
        $region20: #{tpu_custom_call.1} parent=11 // pred_fallthru
          _
        // Predicated region
        $region21: #{tpu_custom_call.1} parent=11 // pred_check
          %p182 = pneg %p123
        $region22: #{tpu_custom_call.1} parent=11 // pred_check_branch
          %184 = sbr.rel (%p182) target = $region24
        $region23: #{tpu_custom_call.1} parent=11 // pred_region
          %p185 = scmp.lt.s32.totalorder %s27, 0
          %s186 = scalar_select %p185, %s27, 0
          %s187 = smul.addr %s186, 2
          %s188 = scalar_lea.vmem %s3, %s187
        $region24: #{tpu_custom_call.1} parent=11 // pred_fallthru
          _
      $region12: #{tpu_custom_call.1} parent=5 // pred_fallthru
        _
      %p189 = scmp.lt.s32.totalorder %s17, 2
      // Predicated region
      $region25: #{tpu_custom_call.1} parent=5 // pred_check
        %p190 = pneg %p189
      $region26: #{tpu_custom_call.1} parent=5 // pred_check_branch
        %192 = sbr.rel (%p190) target = $region28
      $region27: #{tpu_custom_call.1} parent=5 // pred_region
        // Predicated region
        $region29: #{tpu_custom_call.1} parent=27 // pred_check
          %p193 = pneg %p49
        $region30: #{tpu_custom_call.1} parent=27 // pred_check_branch
          %195 = sbr.rel (%p193) target = $region32
        $region31: #{tpu_custom_call.1} parent=27 // pred_region
          %s196 = sand.u32 %s39, 1
          %s197 = scalar_lea.sflag [#allocation6], %s196
          %s198 = sand.u32 %s39, 1
          %s199 = smul.addr %s198, 8
          %s200 = scalar_lea.vmem [#allocation5], %s199
          %s202 = ssub.s32 128, 128
          %203 = vsyncadd %s197, %s202
          %s204 = smul.addr %s24, 128
          %s205 = scalar_lea.hbm %s0, %s204
          %s207 = sshll.u32 %s200, 4
          %s208 = int_to_ptr.vmem [resolvable:$true] %s207
          %210 = dma.hbm_to_vmem [thread:$0]  %s205, 128, %s208, %s197
        $region32: #{tpu_custom_call.1} parent=27 // pred_fallthru
          _
      $region28: #{tpu_custom_call.1} parent=5 // pred_fallthru
        _
      %p211 = scmp.le.s32.totalorder 1, %s17
      %p212 = scmp.lt.s32.totalorder %s17, 3
      %p213 = pnand %p211, %p212
      %p214 = pneg %p213
      // Predicated region
      $region33: #{tpu_custom_call.1} parent=5 // pred_check
        _
      $region34: #{tpu_custom_call.1} parent=5 // pred_check_branch
        %216 = sbr.rel (%p213) target = $region36
      $region35: #{tpu_custom_call.1} parent=5 // pred_region
        %s217 = ssub.s32 %s17, 1
        %s218 = sand.u32 %s42, 1
        %s219 = scalar_lea.sflag [#allocation6], %s218
        %s220 = sand.u32 %s42, 1
        %s221 = smul.addr %s220, 8
        %s222 = scalar_lea.vmem [#allocation5], %s221
        // Predicated region
        $region37: #{tpu_custom_call.1} parent=35 // pred_check
          %p223 = pneg %p55
        $region38: #{tpu_custom_call.1} parent=35 // pred_check_branch
          %225 = sbr.rel (%p223) target = $region40
        $region39: #{tpu_custom_call.1} parent=35 // pred_region
          %226 = dma.done %s219, 128
        $region40: #{tpu_custom_call.1} parent=35 // pred_fallthru
          _
        // Predicated region
        $region41: #{tpu_custom_call.1} parent=35 // pred_check
          %p227 = pneg %p76
        $region42: #{tpu_custom_call.1} parent=35 // pred_check_branch
          %229 = sbr.rel (%p227) target = $region44
        $region43: #{tpu_custom_call.1} parent=35 // pred_region
          %230 = dma.done [#allocation9], 512
        $region44: #{tpu_custom_call.1} parent=35 // pred_fallthru
          _
        %s231 = sand.u32 %s42, 1
        %s232 = scalar_lea.sflag [#allocation6], %s231
        %s233 = sand.u32 %s42, 1
        %s234 = smul.addr %s233, 8
        %s235 = scalar_lea.vmem [#allocation5], %s234
        %p236 = pneg %p55
        %p237 = pneg %p52
        %p238 = pneg %p76
        %p239 = pneg %p73
        %p240 = pneg %p97
        %p241 = pneg %p94
        %p242 = scmp.lt.s32.totalorder %s27, 0
        %s243 = scalar_select %p242, %s27, 0
        %s244 = smul.addr %s243, 2
        %s245 = scalar_lea.vmem %s3, %s244
        %p246 = pneg %p123
        %p247 = pneg %p120
        %p248 = pneg %p151
        %p249 = pneg %p148
        %s250 = sand.u32 %s138, 1
        %s251 = scalar_lea.sflag [#allocation7], %s250
        %s252 = sand.u32 %s138, 1
        %s253 = smul.addr %s252, 8
        %s254 = scalar_lea.vmem [#allocation10], %s253
        %p255 = scmp.lt.s32.totalorder %s27, 0
        %s256 = scalar_select %p255, %s27, 0
        %s257 = smul.addr %s256, 2
        %s258 = scalar_lea.vmem %s3, %s257
        %p261 = scmp.eq.s32.totalorder %s27, 0
        // Predicated region
        $region45: #{tpu_custom_call.1} parent=35 // pred_check
          %p262 = pneg %p261
        $region46: #{tpu_custom_call.1} parent=35 // pred_check_branch
          %264 = sbr.rel (%p262) target = $region48
        $region47: #{tpu_custom_call.1} parent=35 // pred_region
          %v265 = vld [vmem:[%s222] sm:$0xff]
          %v266 = vld [vmem:[#allocation8] sm:$0xff]
          %v267 = vld [vmem:[#allocation8 + $0x8] sm:$0xff]
          %v268 = vld [vmem:[#allocation8 + $0x10] sm:$0xff]
          %v269 = vld [vmem:[#allocation8 + $0x18] sm:$0xff]
          %v270 = vld [vmem:[%s2] sm:$0x1]
          %v272 = vlaneseq
          %v273 = vshrl.u32 %v272, 7
          %v274 = vsub.s32 0, %v273
          %v275 = vrot.slane %v270, %v274
          %vm277 = vcmask 261120
          %v279 = vsel %vm277, %v265, 0
          %281 = vmatprep.subr.mxu0 0.0
          %282 = vmatpush1.msra.mxu0 %v266
          %283 = vmatprep.subr.mxu0 0.0
          %284 = vmatpush1.msra.mxu0 %v267
          %285 = vmatprep.subr.mxu0 0.0
          %286 = vmatpush1.msra.mxu0 %v268
          %287 = vmatprep.subr.mxu0 0.0
          %288 = vmatpush1.msra.mxu0 %v269
          %289 = vmatprep.subr.mxu0 0.0
          %290 = vmatpush1.msra.mxu0 0.0
          %291 = vmatprep.subr.mxu0 0.0
          %292 = vmatpush1.msra.mxu0 0.0
          %293 = vmatprep.subr.mxu0 0.0
          %294 = vmatpush1.msra.mxu0 0.0
          %295 = vmatprep.subr.mxu0 0.0
          %296 = vmatpush1.msra.mxu0 0.0
          %297 = vmatprep.subr.mxu0 0.0
          %298 = vmatpush1.msra.mxu0 0.0
          %299 = vmatprep.subr.mxu0 0.0
          %300 = vmatpush1.msra.mxu0 0.0
          %301 = vmatprep.subr.mxu0 0.0
          %302 = vmatpush1.msra.mxu0 0.0
          %303 = vmatprep.subr.mxu0 0.0
          %304 = vmatpush1.msra.mxu0 0.0
          %305 = vmatprep.subr.mxu0 0.0
          %306 = vmatpush1.msra.mxu0 0.0
          %307 = vmatprep.subr.mxu0 0.0
          %308 = vmatpush1.msra.mxu0 0.0
          %309 = vmatprep.subr.mxu0 0.0
          %310 = vmatpush1.msra.mxu0 0.0
          %311 = vmatprep.subr.mxu0 0.0
          %312 = vmatpush1.msra.mxu0 0.0
          %313 = vmatprep.subr.mxu0 0.0
          %314 = vmatpush1.msra.mxu0 0.0
          %315 = vmatprep.subr.mxu0 0.0
          %316 = vmatpush1.msra.mxu0 0.0
          %317 = vmatprep.subr.mxu0 0.0
          %318 = vmatpush1.msra.mxu0 0.0
          %319 = vmatprep.subr.mxu0 0.0
          %320 = vmatpush1.msra.mxu0 0.0
          %321 = vmatprep.subr.mxu0 0.0
          %322 = vmatpush1.msra.mxu0 0.0
          %323 = vmatprep.subr.mxu0 0.0
          %324 = vmatpush1.msra.mxu0 0.0
          %325 = vmatprep.subr.mxu0 0.0
          %326 = vmatpush1.msra.mxu0 0.0
          %327 = vmatprep.subr.mxu0 0.0
          %328 = vmatpush1.msra.mxu0 0.0
          %329 = vmatprep.subr.mxu0 0.0
          %330 = vmatpush1.msra.mxu0 0.0
          %331 = vmatprep.subr.mxu0 0.0
          %332 = vmatpush1.msra.mxu0 0.0
          %333 = vmatprep.subr.mxu0 0.0
          %334 = vmatpush1.msra.mxu0 0.0
          %335 = vmatprep.subr.mxu0 0.0
          %336 = vmatpush1.msra.mxu0 0.0
          %337 = vmatprep.subr.mxu0 0.0
          %338 = vmatpush1.msra.mxu0 0.0
          %339 = vmatprep.subr.mxu0 0.0
          %340 = vmatpush1.msra.mxu0 0.0
          %341 = vmatprep.subr.mxu0 0.0
          %342 = vmatpush1.msra.mxu0 0.0
          %343 = vmatprep.subr.mxu0 0.0
          %344 = vmatpush1.msra.mxu0 0.0
          %345 = vmatprep.mubr.f32.mxu0 0.0
          %346 = vmatmul.mubr.f32.gmra.mrb[0].mxu0 %v279
          %v347 = vpop.f32.mrb[0].mxu0
          %v348 = vadd.f32 %v275, %v347
          %v349 = vpop.f32.mrb[0].mxu0
          %350 = vdwg.mxu0
          %v351 = vmul.f32 %v348, 0.35355338
          %vm352 = vcmask 64512
          %353 = vst.msk [vmem:[#allocation2] sm:$0xff] %vm352, %v351
          %355 = vrot.lane.b32.xlu0 %v348, 96
          %v356 = vpop.permute.xlu0 %355
          %358 = vst.msk [vmem:[#allocation3] sm:$0xff] %vm352, %v356
          %359 = vrot.lane.b32.xlu0 %v348, 64
          %v360 = vpop.permute.xlu0 %359
          %362 = vst.msk [vmem:[#allocation4] sm:$0xff] %vm352, %v360
          %364 = vrot.lane.b32.xlu0 %v351, 120
          %v365 = vpop.permute.xlu0 %364
          %s367 = scalar_lea.vmem [#allocation2], 8
          %368 = vst.msk [vmem:[%s367] sm:$0xff] %vm352, %v365
          %369 = vrot.lane.b32.xlu0 %v348, 88
          %v370 = vpop.permute.xlu0 %369
          %s372 = scalar_lea.vmem [#allocation3], 8
          %373 = vst.msk [vmem:[%s372] sm:$0xff] %vm352, %v370
          %374 = vrot.lane.b32.xlu0 %v348, 56
          %v375 = vpop.permute.xlu0 %374
          %s377 = scalar_lea.vmem [#allocation4], 8
          %378 = vst.msk [vmem:[%s377] sm:$0xff] %vm352, %v375
          %379 = vrot.lane.b32.xlu0 %v351, 112
          %v380 = vpop.permute.xlu0 %379
          %s382 = scalar_lea.vmem [#allocation2], 16
          %383 = vst.msk [vmem:[%s382] sm:$0xff] %vm352, %v380
          %384 = vrot.lane.b32.xlu0 %v348, 80
          %v385 = vpop.permute.xlu0 %384
          %s387 = scalar_lea.vmem [#allocation3], 16
          %388 = vst.msk [vmem:[%s387] sm:$0xff] %vm352, %v385
          %389 = vrot.lane.b32.xlu0 %v348, 48
          %v390 = vpop.permute.xlu0 %389
          %s392 = scalar_lea.vmem [#allocation4], 16
          %393 = vst.msk [vmem:[%s392] sm:$0xff] %vm352, %v390
          %394 = vrot.lane.b32.xlu0 %v351, 104
          %v395 = vpop.permute.xlu0 %394
          %s397 = scalar_lea.vmem [#allocation2], 24
          %398 = vst.msk [vmem:[%s397] sm:$0xff] %vm352, %v395
          %399 = vrot.lane.b32.xlu0 %v348, 72
          %v400 = vpop.permute.xlu0 %399
          %s402 = scalar_lea.vmem [#allocation3], 24
          %403 = vst.msk [vmem:[%s402] sm:$0xff] %vm352, %v400
          %404 = vrot.lane.b32.xlu0 %v348, 40
          %v405 = vpop.permute.xlu0 %404
          %s407 = scalar_lea.vmem [#allocation4], 24
          %408 = vst.msk [vmem:[%s407] sm:$0xff] %vm352, %v405
        $region48: #{tpu_custom_call.1} parent=35 // pred_fallthru
          _
        %s409 = smul.u32 %s27, 8
        %s410 = scalar_lea.vmem [#allocation2], %s409
        %v411 = vld [vmem:[%s410] sm:$0xff]
        %v412 = vld [vmem:[%s410 + $0x8] sm:$0xff]
        %v413 = vld [vmem:[%s410 + $0x10] sm:$0xff]
        %v414 = vld [vmem:[%s410 + $0x18] sm:$0xff]
        %v415 = vld [vmem:[#allocation3] sm:$0xff]
        %v416 = vld [vmem:[#allocation3 + $0x8] sm:$0xff]
        %v417 = vld [vmem:[#allocation3 + $0x10] sm:$0xff]
        %v418 = vld [vmem:[#allocation3 + $0x18] sm:$0xff]
        %v419 = vld [vmem:[#allocation4] sm:$0xff]
        %v420 = vld [vmem:[#allocation4 + $0x8] sm:$0xff]
        %v421 = vld [vmem:[#allocation4 + $0x10] sm:$0xff]
        %v422 = vld [vmem:[#allocation4 + $0x18] sm:$0xff]
        %vm423 = vcmask 64512
        %v425 = vsel %vm423, %v411, 0
        %v428 = vsel %vm423, %v415, 0
        %430 = vmatprep.subr.mxu0 0.0
        %431 = vmatpush1.xpose.msra.mxu0 %v428
        %432 = vmatprep.subr.mxu0 0.0
        %433 = vmatpush1.xpose.msra.mxu0 0.0
        %434 = vmatprep.subr.mxu0 0.0
        %435 = vmatpush1.xpose.msra.mxu0 0.0
        %436 = vmatprep.subr.mxu0 0.0
        %437 = vmatpush1.xpose.msra.mxu0 0.0
        %438 = vmatprep.subr.mxu0 0.0
        %439 = vmatpush1.xpose.msra.mxu0 0.0
        %440 = vmatprep.subr.mxu0 0.0
        %441 = vmatpush1.xpose.msra.mxu0 0.0
        %442 = vmatprep.subr.mxu0 0.0
        %443 = vmatpush1.xpose.msra.mxu0 0.0
        %444 = vmatprep.subr.mxu0 0.0
        %445 = vmatpush1.xpose.msra.mxu0 0.0
        %446 = vmatprep.subr.mxu0 0.0
        %447 = vmatpush1.xpose.msra.mxu0 0.0
        %448 = vmatprep.subr.mxu0 0.0
        %449 = vmatpush1.xpose.msra.mxu0 0.0
        %450 = vmatprep.subr.mxu0 0.0
        %451 = vmatpush1.xpose.msra.mxu0 0.0
        %452 = vmatprep.subr.mxu0 0.0
        %453 = vmatpush1.xpose.msra.mxu0 0.0
        %454 = vmatprep.subr.mxu0 0.0
        %455 = vmatpush1.xpose.msra.mxu0 0.0
        %456 = vmatprep.subr.mxu0 0.0
        %457 = vmatpush1.xpose.msra.mxu0 0.0
        %458 = vmatprep.subr.mxu0 0.0
        %459 = vmatpush1.xpose.msra.mxu0 0.0
        %460 = vmatprep.subr.mxu0 0.0
        %461 = vmatpush1.xpose.msra.mxu0 0.0
        %462 = vmatprep.subr.mxu0 0.0
        %463 = vmatpush1.xpose.msra.mxu0 0.0
        %464 = vmatprep.subr.mxu0 0.0
        %465 = vmatpush1.xpose.msra.mxu0 0.0
        %466 = vmatprep.subr.mxu0 0.0
        %467 = vmatpush1.xpose.msra.mxu0 0.0
        %468 = vmatprep.subr.mxu0 0.0
        %469 = vmatpush1.xpose.msra.mxu0 0.0
        %470 = vmatprep.subr.mxu0 0.0
        %471 = vmatpush1.xpose.msra.mxu0 0.0
        %472 = vmatprep.subr.mxu0 0.0
        %473 = vmatpush1.xpose.msra.mxu0 0.0
        %474 = vmatprep.subr.mxu0 0.0
        %475 = vmatpush1.xpose.msra.mxu0 0.0
        %476 = vmatprep.subr.mxu0 0.0
        %477 = vmatpush1.xpose.msra.mxu0 0.0
        %478 = vmatprep.subr.mxu0 0.0
        %479 = vmatpush1.xpose.msra.mxu0 0.0
        %480 = vmatprep.subr.mxu0 0.0
        %481 = vmatpush1.xpose.msra.mxu0 0.0
        %482 = vmatprep.subr.mxu0 0.0
        %483 = vmatpush1.xpose.msra.mxu0 0.0
        %484 = vmatprep.subr.mxu0 0.0
        %485 = vmatpush1.xpose.msra.mxu0 0.0
        %486 = vmatprep.subr.mxu0 0.0
        %487 = vmatpush1.xpose.msra.mxu0 0.0
        %488 = vmatprep.subr.mxu0 0.0
        %489 = vmatpush1.xpose.msra.mxu0 0.0
        %490 = vmatprep.subr.mxu0 0.0
        %491 = vmatpush1.xpose.msra.mxu0 0.0
        %492 = vmatprep.subr.mxu0 0.0
        %493 = vmatpush1.xpose.msra.mxu0 0.0
        %494 = vmatprep.mubr.f32.mxu0 0.0
        %495 = vmatmul.mubr.f32.gmra.mrb[0].mxu0 %v425
        %v496 = vpop.f32.mrb[0].mxu0
        %v497 = vadd.f32 0.0, %v496
        %v498 = vpop.f32.mrb[0].mxu0
        %499 = vdwg.mxu0
        %v501 = vsel %vm423, %v412, 0
        %v504 = vsel %vm423, %v416, 0
        %506 = vmatprep.subr.mxu0 0.0
        %507 = vmatpush1.xpose.msra.mxu0 %v504
        %508 = vmatprep.subr.mxu0 0.0
        %509 = vmatpush1.xpose.msra.mxu0 0.0
        %510 = vmatprep.subr.mxu0 0.0
        %511 = vmatpush1.xpose.msra.mxu0 0.0
        %512 = vmatprep.subr.mxu0 0.0
        %513 = vmatpush1.xpose.msra.mxu0 0.0
        %514 = vmatprep.subr.mxu0 0.0
        %515 = vmatpush1.xpose.msra.mxu0 0.0
        %516 = vmatprep.subr.mxu0 0.0
        %517 = vmatpush1.xpose.msra.mxu0 0.0
        %518 = vmatprep.subr.mxu0 0.0
        %519 = vmatpush1.xpose.msra.mxu0 0.0
        %520 = vmatprep.subr.mxu0 0.0
        %521 = vmatpush1.xpose.msra.mxu0 0.0
        %522 = vmatprep.subr.mxu0 0.0
        %523 = vmatpush1.xpose.msra.mxu0 0.0
        %524 = vmatprep.subr.mxu0 0.0
        %525 = vmatpush1.xpose.msra.mxu0 0.0
        %526 = vmatprep.subr.mxu0 0.0
        %527 = vmatpush1.xpose.msra.mxu0 0.0
        %528 = vmatprep.subr.mxu0 0.0
        %529 = vmatpush1.xpose.msra.mxu0 0.0
        %530 = vmatprep.subr.mxu0 0.0
        %531 = vmatpush1.xpose.msra.mxu0 0.0
        %532 = vmatprep.subr.mxu0 0.0
        %533 = vmatpush1.xpose.msra.mxu0 0.0
        %534 = vmatprep.subr.mxu0 0.0
        %535 = vmatpush1.xpose.msra.mxu0 0.0
        %536 = vmatprep.subr.mxu0 0.0
        %537 = vmatpush1.xpose.msra.mxu0 0.0
        %538 = vmatprep.subr.mxu0 0.0
        %539 = vmatpush1.xpose.msra.mxu0 0.0
        %540 = vmatprep.subr.mxu0 0.0
        %541 = vmatpush1.xpose.msra.mxu0 0.0
        %542 = vmatprep.subr.mxu0 0.0
        %543 = vmatpush1.xpose.msra.mxu0 0.0
        %544 = vmatprep.subr.mxu0 0.0
        %545 = vmatpush1.xpose.msra.mxu0 0.0
        %546 = vmatprep.subr.mxu0 0.0
        %547 = vmatpush1.xpose.msra.mxu0 0.0
        %548 = vmatprep.subr.mxu0 0.0
        %549 = vmatpush1.xpose.msra.mxu0 0.0
        %550 = vmatprep.subr.mxu0 0.0
        %551 = vmatpush1.xpose.msra.mxu0 0.0
        %552 = vmatprep.subr.mxu0 0.0
        %553 = vmatpush1.xpose.msra.mxu0 0.0
        %554 = vmatprep.subr.mxu0 0.0
        %555 = vmatpush1.xpose.msra.mxu0 0.0
        %556 = vmatprep.subr.mxu0 0.0
        %557 = vmatpush1.xpose.msra.mxu0 0.0
        %558 = vmatprep.subr.mxu0 0.0
        %559 = vmatpush1.xpose.msra.mxu0 0.0
        %560 = vmatprep.subr.mxu0 0.0
        %561 = vmatpush1.xpose.msra.mxu0 0.0
        %562 = vmatprep.subr.mxu0 0.0
        %563 = vmatpush1.xpose.msra.mxu0 0.0
        %564 = vmatprep.subr.mxu0 0.0
        %565 = vmatpush1.xpose.msra.mxu0 0.0
        %566 = vmatprep.subr.mxu0 0.0
        %567 = vmatpush1.xpose.msra.mxu0 0.0
        %568 = vmatprep.subr.mxu0 0.0
        %569 = vmatpush1.xpose.msra.mxu0 0.0
        %570 = vmatprep.mubr.f32.mxu0 0.0
        %571 = vmatmul.mubr.f32.gmra.mrb[0].mxu0 %v501
        %v572 = vpop.f32.mrb[0].mxu0
        %v573 = vadd.f32 0.0, %v572
        %v574 = vpop.f32.mrb[0].mxu0
        %575 = vdwg.mxu0
        %v577 = vsel %vm423, %v413, 0
        %v580 = vsel %vm423, %v417, 0
        %582 = vmatprep.subr.mxu0 0.0
        %583 = vmatpush1.xpose.msra.mxu0 %v580
        %584 = vmatprep.subr.mxu0 0.0
        %585 = vmatpush1.xpose.msra.mxu0 0.0
        %586 = vmatprep.subr.mxu0 0.0
        %587 = vmatpush1.xpose.msra.mxu0 0.0
        %588 = vmatprep.subr.mxu0 0.0
        %589 = vmatpush1.xpose.msra.mxu0 0.0
        %590 = vmatprep.subr.mxu0 0.0
        %591 = vmatpush1.xpose.msra.mxu0 0.0
        %592 = vmatprep.subr.mxu0 0.0
        %593 = vmatpush1.xpose.msra.mxu0 0.0
        %594 = vmatprep.subr.mxu0 0.0
        %595 = vmatpush1.xpose.msra.mxu0 0.0
        %596 = vmatprep.subr.mxu0 0.0
        %597 = vmatpush1.xpose.msra.mxu0 0.0
        %598 = vmatprep.subr.mxu0 0.0
        %599 = vmatpush1.xpose.msra.mxu0 0.0
        %600 = vmatprep.subr.mxu0 0.0
        %601 = vmatpush1.xpose.msra.mxu0 0.0
        %602 = vmatprep.subr.mxu0 0.0
        %603 = vmatpush1.xpose.msra.mxu0 0.0
        %604 = vmatprep.subr.mxu0 0.0
        %605 = vmatpush1.xpose.msra.mxu0 0.0
        %606 = vmatprep.subr.mxu0 0.0
        %607 = vmatpush1.xpose.msra.mxu0 0.0
        %608 = vmatprep.subr.mxu0 0.0
        %609 = vmatpush1.xpose.msra.mxu0 0.0
        %610 = vmatprep.subr.mxu0 0.0
        %611 = vmatpush1.xpose.msra.mxu0 0.0
        %612 = vmatprep.subr.mxu0 0.0
        %613 = vmatpush1.xpose.msra.mxu0 0.0
        %614 = vmatprep.subr.mxu0 0.0
        %615 = vmatpush1.xpose.msra.mxu0 0.0
        %616 = vmatprep.subr.mxu0 0.0
        %617 = vmatpush1.xpose.msra.mxu0 0.0
        %618 = vmatprep.subr.mxu0 0.0
        %619 = vmatpush1.xpose.msra.mxu0 0.0
        %620 = vmatprep.subr.mxu0 0.0
        %621 = vmatpush1.xpose.msra.mxu0 0.0
        %622 = vmatprep.subr.mxu0 0.0
        %623 = vmatpush1.xpose.msra.mxu0 0.0
        %624 = vmatprep.subr.mxu0 0.0
        %625 = vmatpush1.xpose.msra.mxu0 0.0
        %626 = vmatprep.subr.mxu0 0.0
        %627 = vmatpush1.xpose.msra.mxu0 0.0
        %628 = vmatprep.subr.mxu0 0.0
        %629 = vmatpush1.xpose.msra.mxu0 0.0
        %630 = vmatprep.subr.mxu0 0.0
        %631 = vmatpush1.xpose.msra.mxu0 0.0
        %632 = vmatprep.subr.mxu0 0.0
        %633 = vmatpush1.xpose.msra.mxu0 0.0
        %634 = vmatprep.subr.mxu0 0.0
        %635 = vmatpush1.xpose.msra.mxu0 0.0
        %636 = vmatprep.subr.mxu0 0.0
        %637 = vmatpush1.xpose.msra.mxu0 0.0
        %638 = vmatprep.subr.mxu0 0.0
        %639 = vmatpush1.xpose.msra.mxu0 0.0
        %640 = vmatprep.subr.mxu0 0.0
        %641 = vmatpush1.xpose.msra.mxu0 0.0
        %642 = vmatprep.subr.mxu0 0.0
        %643 = vmatpush1.xpose.msra.mxu0 0.0
        %644 = vmatprep.subr.mxu0 0.0
        %645 = vmatpush1.xpose.msra.mxu0 0.0
        %646 = vmatprep.mubr.f32.mxu0 0.0
        %647 = vmatmul.mubr.f32.gmra.mrb[0].mxu0 %v577
        %v648 = vpop.f32.mrb[0].mxu0
        %v649 = vadd.f32 0.0, %v648
        %v650 = vpop.f32.mrb[0].mxu0
        %651 = vdwg.mxu0
        %v653 = vsel %vm423, %v414, 0
        %v656 = vsel %vm423, %v418, 0
        %658 = vmatprep.subr.mxu0 0.0
        %659 = vmatpush1.xpose.msra.mxu0 %v656
        %660 = vmatprep.subr.mxu0 0.0
        %661 = vmatpush1.xpose.msra.mxu0 0.0
        %662 = vmatprep.subr.mxu0 0.0
        %663 = vmatpush1.xpose.msra.mxu0 0.0
        %664 = vmatprep.subr.mxu0 0.0
        %665 = vmatpush1.xpose.msra.mxu0 0.0
        %666 = vmatprep.subr.mxu0 0.0
        %667 = vmatpush1.xpose.msra.mxu0 0.0
        %668 = vmatprep.subr.mxu0 0.0
        %669 = vmatpush1.xpose.msra.mxu0 0.0
        %670 = vmatprep.subr.mxu0 0.0
        %671 = vmatpush1.xpose.msra.mxu0 0.0
        %672 = vmatprep.subr.mxu0 0.0
        %673 = vmatpush1.xpose.msra.mxu0 0.0
        %674 = vmatprep.subr.mxu0 0.0
        %675 = vmatpush1.xpose.msra.mxu0 0.0
        %676 = vmatprep.subr.mxu0 0.0
        %677 = vmatpush1.xpose.msra.mxu0 0.0
        %678 = vmatprep.subr.mxu0 0.0
        %679 = vmatpush1.xpose.msra.mxu0 0.0
        %680 = vmatprep.subr.mxu0 0.0
        %681 = vmatpush1.xpose.msra.mxu0 0.0
        %682 = vmatprep.subr.mxu0 0.0
        %683 = vmatpush1.xpose.msra.mxu0 0.0
        %684 = vmatprep.subr.mxu0 0.0
        %685 = vmatpush1.xpose.msra.mxu0 0.0
        %686 = vmatprep.subr.mxu0 0.0
        %687 = vmatpush1.xpose.msra.mxu0 0.0
        %688 = vmatprep.subr.mxu0 0.0
        %689 = vmatpush1.xpose.msra.mxu0 0.0
        %690 = vmatprep.subr.mxu0 0.0
        %691 = vmatpush1.xpose.msra.mxu0 0.0
        %692 = vmatprep.subr.mxu0 0.0
        %693 = vmatpush1.xpose.msra.mxu0 0.0
        %694 = vmatprep.subr.mxu0 0.0
        %695 = vmatpush1.xpose.msra.mxu0 0.0
        %696 = vmatprep.subr.mxu0 0.0
        %697 = vmatpush1.xpose.msra.mxu0 0.0
        %698 = vmatprep.subr.mxu0 0.0
        %699 = vmatpush1.xpose.msra.mxu0 0.0
        %700 = vmatprep.subr.mxu0 0.0
        %701 = vmatpush1.xpose.msra.mxu0 0.0
        %702 = vmatprep.subr.mxu0 0.0
        %703 = vmatpush1.xpose.msra.mxu0 0.0
        %704 = vmatprep.subr.mxu0 0.0
        %705 = vmatpush1.xpose.msra.mxu0 0.0
        %706 = vmatprep.subr.mxu0 0.0
        %707 = vmatpush1.xpose.msra.mxu0 0.0
        %708 = vmatprep.subr.mxu0 0.0
        %709 = vmatpush1.xpose.msra.mxu0 0.0
        %710 = vmatprep.subr.mxu0 0.0
        %711 = vmatpush1.xpose.msra.mxu0 0.0
        %712 = vmatprep.subr.mxu0 0.0
        %713 = vmatpush1.xpose.msra.mxu0 0.0
        %714 = vmatprep.subr.mxu0 0.0
        %715 = vmatpush1.xpose.msra.mxu0 0.0
        %716 = vmatprep.subr.mxu0 0.0
        %717 = vmatpush1.xpose.msra.mxu0 0.0
        %718 = vmatprep.subr.mxu0 0.0
        %719 = vmatpush1.xpose.msra.mxu0 0.0
        %720 = vmatprep.subr.mxu0 0.0
        %721 = vmatpush1.xpose.msra.mxu0 0.0
        %722 = vmatprep.mubr.f32.mxu0 0.0
        %723 = vmatmul.mubr.f32.gmra.mrb[0].mxu0 %v653
        %v724 = vpop.f32.mrb[0].mxu0
        %v725 = vadd.f32 0.0, %v724
        %v726 = vpop.f32.mrb[0].mxu0
        %727 = vdwg.mxu0
        %v728 = vld [vmem:[%s258] sm:$0x3]
        %vm729 = vnez %v728
        %v730 = vsel %vm729, 16843009, 0
        %v731 = vunpack.c.0.s8 %v730
        %vm732 = vcmp.ne.s32.totalorder %v731, 0
        %v733 = vsel %vm732, 1, 0
        %vm734 = vcmp.eq.s32.totalorder %v733, 1
        %v735 = vsel %vm734, -3.5355338e+09, %v497
        %v736 = vsel %vm734, -3.5355338e+09, %v573
        %v737 = vsel %vm734, -3.5355338e+09, %v649
        %v738 = vsel %vm734, -3.5355338e+09, %v725
        %v739 = vsel %vm423, %v735, -inf
        %740 = vmax.xlane.f32.xlu0 %v739
        %v741 = vpop.xlane.xlu0 %740
        %v742 = vsel %vm423, %v736, -inf
        %743 = vmax.xlane.f32.xlu0 %v742
        %v744 = vpop.xlane.xlu0 %743
        %v745 = vsel %vm423, %v737, -inf
        %746 = vmax.xlane.f32.xlu0 %v745
        %v747 = vpop.xlane.xlu0 %746
        %v748 = vsel %vm423, %v738, -inf
        %749 = vmax.xlane.f32.xlu0 %v748
        %v750 = vpop.xlane.xlu0 %749
        %v751 = vsub.f32 %v735, %v741
        %v752 = vsub.f32 %v736, %v744
        %v753 = vsub.f32 %v737, %v747
        %v754 = vsub.f32 %v738, %v750
        %v755 = vmul.f32 %v751, 1.442695
        %v756 = vpow.pop %v755
        %v757 = vmul.f32 %v752, 1.442695
        %v758 = vpow.pop %v757
        %v759 = vmul.f32 %v753, 1.442695
        %v760 = vpow.pop %v759
        %v761 = vmul.f32 %v754, 1.442695
        %v762 = vpow.pop %v761
        %v763 = vsel %vm423, %v756, 0.0
        %764 = vadd.xlane.f32.xlu0 %v763
        %v765 = vpop.xlane.xlu0 %764
        %v766 = vsel %vm423, %v758, 0.0
        %767 = vadd.xlane.f32.xlu0 %v766
        %v768 = vpop.xlane.xlu0 %767
        %v769 = vsel %vm423, %v760, 0.0
        %770 = vadd.xlane.f32.xlu0 %v769
        %v771 = vpop.xlane.xlu0 %770
        %v772 = vsel %vm423, %v762, 0.0
        %773 = vadd.xlane.f32.xlu0 %v772
        %v774 = vpop.xlane.xlu0 %773
        %v776 = vsel %vm423, %v756, 0
        %778 = vmatprep.subr.mxu0 0.0
        %779 = vmatpush1.msra.mxu0 %v419
        %780 = vmatprep.subr.mxu0 0.0
        %781 = vmatpush1.msra.mxu0 0.0
        %782 = vmatprep.subr.mxu0 0.0
        %783 = vmatpush1.msra.mxu0 0.0
        %784 = vmatprep.subr.mxu0 0.0
        %785 = vmatpush1.msra.mxu0 0.0
        %786 = vmatprep.subr.mxu0 0.0
        %787 = vmatpush1.msra.mxu0 0.0
        %788 = vmatprep.subr.mxu0 0.0
        %789 = vmatpush1.msra.mxu0 0.0
        %790 = vmatprep.subr.mxu0 0.0
        %791 = vmatpush1.msra.mxu0 0.0
        %792 = vmatprep.subr.mxu0 0.0
        %793 = vmatpush1.msra.mxu0 0.0
        %794 = vmatprep.subr.mxu0 0.0
        %795 = vmatpush1.msra.mxu0 0.0
        %796 = vmatprep.subr.mxu0 0.0
        %797 = vmatpush1.msra.mxu0 0.0
        %798 = vmatprep.subr.mxu0 0.0
        %799 = vmatpush1.msra.mxu0 0.0
        %800 = vmatprep.subr.mxu0 0.0
        %801 = vmatpush1.msra.mxu0 0.0
        %802 = vmatprep.subr.mxu0 0.0
        %803 = vmatpush1.msra.mxu0 0.0
        %804 = vmatprep.subr.mxu0 0.0
        %805 = vmatpush1.msra.mxu0 0.0
        %806 = vmatprep.subr.mxu0 0.0
        %807 = vmatpush1.msra.mxu0 0.0
        %808 = vmatprep.subr.mxu0 0.0
        %809 = vmatpush1.msra.mxu0 0.0
        %810 = vmatprep.subr.mxu0 0.0
        %811 = vmatpush1.msra.mxu0 0.0
        %812 = vmatprep.subr.mxu0 0.0
        %813 = vmatpush1.msra.mxu0 0.0
        %814 = vmatprep.subr.mxu0 0.0
        %815 = vmatpush1.msra.mxu0 0.0
        %816 = vmatprep.subr.mxu0 0.0
        %817 = vmatpush1.msra.mxu0 0.0
        %818 = vmatprep.subr.mxu0 0.0
        %819 = vmatpush1.msra.mxu0 0.0
        %820 = vmatprep.subr.mxu0 0.0
        %821 = vmatpush1.msra.mxu0 0.0
        %822 = vmatprep.subr.mxu0 0.0
        %823 = vmatpush1.msra.mxu0 0.0
        %824 = vmatprep.subr.mxu0 0.0
        %825 = vmatpush1.msra.mxu0 0.0
        %826 = vmatprep.subr.mxu0 0.0
        %827 = vmatpush1.msra.mxu0 0.0
        %828 = vmatprep.subr.mxu0 0.0
        %829 = vmatpush1.msra.mxu0 0.0
        %830 = vmatprep.subr.mxu0 0.0
        %831 = vmatpush1.msra.mxu0 0.0
        %832 = vmatprep.subr.mxu0 0.0
        %833 = vmatpush1.msra.mxu0 0.0
        %834 = vmatprep.subr.mxu0 0.0
        %835 = vmatpush1.msra.mxu0 0.0
        %836 = vmatprep.subr.mxu0 0.0
        %837 = vmatpush1.msra.mxu0 0.0
        %838 = vmatprep.subr.mxu0 0.0
        %839 = vmatpush1.msra.mxu0 0.0
        %840 = vmatprep.subr.mxu0 0.0
        %841 = vmatpush1.msra.mxu0 0.0
        %842 = vmatprep.mubr.f32.mxu0 0.0
        %843 = vmatmul.mubr.f32.gmra.mrb[0].mxu0 %v776
        %v844 = vpop.f32.mrb[0].mxu0
        %v845 = vadd.f32 0.0, %v844
        %v846 = vpop.f32.mrb[0].mxu0
        %847 = vdwg.mxu0
        %v849 = vsel %vm423, %v758, 0
        %851 = vmatprep.subr.mxu0 0.0
        %852 = vmatpush1.msra.mxu0 %v420
        %853 = vmatprep.subr.mxu0 0.0
        %854 = vmatpush1.msra.mxu0 0.0
        %855 = vmatprep.subr.mxu0 0.0
        %856 = vmatpush1.msra.mxu0 0.0
        %857 = vmatprep.subr.mxu0 0.0
        %858 = vmatpush1.msra.mxu0 0.0
        %859 = vmatprep.subr.mxu0 0.0
        %860 = vmatpush1.msra.mxu0 0.0
        %861 = vmatprep.subr.mxu0 0.0
        %862 = vmatpush1.msra.mxu0 0.0
        %863 = vmatprep.subr.mxu0 0.0
        %864 = vmatpush1.msra.mxu0 0.0
        %865 = vmatprep.subr.mxu0 0.0
        %866 = vmatpush1.msra.mxu0 0.0
        %867 = vmatprep.subr.mxu0 0.0
        %868 = vmatpush1.msra.mxu0 0.0
        %869 = vmatprep.subr.mxu0 0.0
        %870 = vmatpush1.msra.mxu0 0.0
        %871 = vmatprep.subr.mxu0 0.0
        %872 = vmatpush1.msra.mxu0 0.0
        %873 = vmatprep.subr.mxu0 0.0
        %874 = vmatpush1.msra.mxu0 0.0
        %875 = vmatprep.subr.mxu0 0.0
        %876 = vmatpush1.msra.mxu0 0.0
        %877 = vmatprep.subr.mxu0 0.0
        %878 = vmatpush1.msra.mxu0 0.0
        %879 = vmatprep.subr.mxu0 0.0
        %880 = vmatpush1.msra.mxu0 0.0
        %881 = vmatprep.subr.mxu0 0.0
        %882 = vmatpush1.msra.mxu0 0.0
        %883 = vmatprep.subr.mxu0 0.0
        %884 = vmatpush1.msra.mxu0 0.0
        %885 = vmatprep.subr.mxu0 0.0
        %886 = vmatpush1.msra.mxu0 0.0
        %887 = vmatprep.subr.mxu0 0.0
        %888 = vmatpush1.msra.mxu0 0.0
        %889 = vmatprep.subr.mxu0 0.0
        %890 = vmatpush1.msra.mxu0 0.0
        %891 = vmatprep.subr.mxu0 0.0
        %892 = vmatpush1.msra.mxu0 0.0
        %893 = vmatprep.subr.mxu0 0.0
        %894 = vmatpush1.msra.mxu0 0.0
        %895 = vmatprep.subr.mxu0 0.0
        %896 = vmatpush1.msra.mxu0 0.0
        %897 = vmatprep.subr.mxu0 0.0
        %898 = vmatpush1.msra.mxu0 0.0
        %899 = vmatprep.subr.mxu0 0.0
        %900 = vmatpush1.msra.mxu0 0.0
        %901 = vmatprep.subr.mxu0 0.0
        %902 = vmatpush1.msra.mxu0 0.0
        %903 = vmatprep.subr.mxu0 0.0
        %904 = vmatpush1.msra.mxu0 0.0
        %905 = vmatprep.subr.mxu0 0.0
        %906 = vmatpush1.msra.mxu0 0.0
        %907 = vmatprep.subr.mxu0 0.0
        %908 = vmatpush1.msra.mxu0 0.0
        %909 = vmatprep.subr.mxu0 0.0
        %910 = vmatpush1.msra.mxu0 0.0
        %911 = vmatprep.subr.mxu0 0.0
        %912 = vmatpush1.msra.mxu0 0.0
        %913 = vmatprep.subr.mxu0 0.0
        %914 = vmatpush1.msra.mxu0 0.0
        %915 = vmatprep.mubr.f32.mxu0 0.0
        %916 = vmatmul.mubr.f32.gmra.mrb[0].mxu0 %v849
        %v917 = vpop.f32.mrb[0].mxu0
        %v918 = vadd.f32 0.0, %v917
        %v919 = vpop.f32.mrb[0].mxu0
        %920 = vdwg.mxu0
        %v922 = vsel %vm423, %v760, 0
        %924 = vmatprep.subr.mxu0 0.0
        %925 = vmatpush1.msra.mxu0 %v421
        %926 = vmatprep.subr.mxu0 0.0
        %927 = vmatpush1.msra.mxu0 0.0
        %928 = vmatprep.subr.mxu0 0.0
        %929 = vmatpush1.msra.mxu0 0.0
        %930 = vmatprep.subr.mxu0 0.0
        %931 = vmatpush1.msra.mxu0 0.0
        %932 = vmatprep.subr.mxu0 0.0
        %933 = vmatpush1.msra.mxu0 0.0
        %934 = vmatprep.subr.mxu0 0.0
        %935 = vmatpush1.msra.mxu0 0.0
        %936 = vmatprep.subr.mxu0 0.0
        %937 = vmatpush1.msra.mxu0 0.0
        %938 = vmatprep.subr.mxu0 0.0
        %939 = vmatpush1.msra.mxu0 0.0
        %940 = vmatprep.subr.mxu0 0.0
        %941 = vmatpush1.msra.mxu0 0.0
        %942 = vmatprep.subr.mxu0 0.0
        %943 = vmatpush1.msra.mxu0 0.0
        %944 = vmatprep.subr.mxu0 0.0
        %945 = vmatpush1.msra.mxu0 0.0
        %946 = vmatprep.subr.mxu0 0.0
        %947 = vmatpush1.msra.mxu0 0.0
        %948 = vmatprep.subr.mxu0 0.0
        %949 = vmatpush1.msra.mxu0 0.0
        %950 = vmatprep.subr.mxu0 0.0
        %951 = vmatpush1.msra.mxu0 0.0
        %952 = vmatprep.subr.mxu0 0.0
        %953 = vmatpush1.msra.mxu0 0.0
        %954 = vmatprep.subr.mxu0 0.0
        %955 = vmatpush1.msra.mxu0 0.0
        %956 = vmatprep.subr.mxu0 0.0
        %957 = vmatpush1.msra.mxu0 0.0
        %958 = vmatprep.subr.mxu0 0.0
        %959 = vmatpush1.msra.mxu0 0.0
        %960 = vmatprep.subr.mxu0 0.0
        %961 = vmatpush1.msra.mxu0 0.0
        %962 = vmatprep.subr.mxu0 0.0
        %963 = vmatpush1.msra.mxu0 0.0
        %964 = vmatprep.subr.mxu0 0.0
        %965 = vmatpush1.msra.mxu0 0.0
        %966 = vmatprep.subr.mxu0 0.0
        %967 = vmatpush1.msra.mxu0 0.0
        %968 = vmatprep.subr.mxu0 0.0
        %969 = vmatpush1.msra.mxu0 0.0
        %970 = vmatprep.subr.mxu0 0.0
        %971 = vmatpush1.msra.mxu0 0.0
        %972 = vmatprep.subr.mxu0 0.0
        %973 = vmatpush1.msra.mxu0 0.0
        %974 = vmatprep.subr.mxu0 0.0
        %975 = vmatpush1.msra.mxu0 0.0
        %976 = vmatprep.subr.mxu0 0.0
        %977 = vmatpush1.msra.mxu0 0.0
        %978 = vmatprep.subr.mxu0 0.0
        %979 = vmatpush1.msra.mxu0 0.0
        %980 = vmatprep.subr.mxu0 0.0
        %981 = vmatpush1.msra.mxu0 0.0
        %982 = vmatprep.subr.mxu0 0.0
        %983 = vmatpush1.msra.mxu0 0.0
        %984 = vmatprep.subr.mxu0 0.0
        %985 = vmatpush1.msra.mxu0 0.0
        %986 = vmatprep.subr.mxu0 0.0
        %987 = vmatpush1.msra.mxu0 0.0
        %988 = vmatprep.mubr.f32.mxu0 0.0
        %989 = vmatmul.mubr.f32.gmra.mrb[0].mxu0 %v922
        %v990 = vpop.f32.mrb[0].mxu0
        %v991 = vadd.f32 0.0, %v990
        %v992 = vpop.f32.mrb[0].mxu0
        %993 = vdwg.mxu0
        %v995 = vsel %vm423, %v762, 0
        %997 = vmatprep.subr.mxu0 0.0
        %998 = vmatpush1.msra.mxu0 %v422
        %999 = vmatprep.subr.mxu0 0.0
        %1000 = vmatpush1.msra.mxu0 0.0
        %1001 = vmatprep.subr.mxu0 0.0
        %1002 = vmatpush1.msra.mxu0 0.0
        %1003 = vmatprep.subr.mxu0 0.0
        %1004 = vmatpush1.msra.mxu0 0.0
        %1005 = vmatprep.subr.mxu0 0.0
        %1006 = vmatpush1.msra.mxu0 0.0
        %1007 = vmatprep.subr.mxu0 0.0
        %1008 = vmatpush1.msra.mxu0 0.0
        %1009 = vmatprep.subr.mxu0 0.0
        %1010 = vmatpush1.msra.mxu0 0.0
        %1011 = vmatprep.subr.mxu0 0.0
        %1012 = vmatpush1.msra.mxu0 0.0
        %1013 = vmatprep.subr.mxu0 0.0
        %1014 = vmatpush1.msra.mxu0 0.0
        %1015 = vmatprep.subr.mxu0 0.0
        %1016 = vmatpush1.msra.mxu0 0.0
        %1017 = vmatprep.subr.mxu0 0.0
        %1018 = vmatpush1.msra.mxu0 0.0
        %1019 = vmatprep.subr.mxu0 0.0
        %1020 = vmatpush1.msra.mxu0 0.0
        %1021 = vmatprep.subr.mxu0 0.0
        %1022 = vmatpush1.msra.mxu0 0.0
        %1023 = vmatprep.subr.mxu0 0.0
        %1024 = vmatpush1.msra.mxu0 0.0
        %1025 = vmatprep.subr.mxu0 0.0
        %1026 = vmatpush1.msra.mxu0 0.0
        %1027 = vmatprep.subr.mxu0 0.0
        %1028 = vmatpush1.msra.mxu0 0.0
        %1029 = vmatprep.subr.mxu0 0.0
        %1030 = vmatpush1.msra.mxu0 0.0
        %1031 = vmatprep.subr.mxu0 0.0
        %1032 = vmatpush1.msra.mxu0 0.0
        %1033 = vmatprep.subr.mxu0 0.0
        %1034 = vmatpush1.msra.mxu0 0.0
        %1035 = vmatprep.subr.mxu0 0.0
        %1036 = vmatpush1.msra.mxu0 0.0
        %1037 = vmatprep.subr.mxu0 0.0
        %1038 = vmatpush1.msra.mxu0 0.0
        %1039 = vmatprep.subr.mxu0 0.0
        %1040 = vmatpush1.msra.mxu0 0.0
        %1041 = vmatprep.subr.mxu0 0.0
        %1042 = vmatpush1.msra.mxu0 0.0
        %1043 = vmatprep.subr.mxu0 0.0
        %1044 = vmatpush1.msra.mxu0 0.0
        %1045 = vmatprep.subr.mxu0 0.0
        %1046 = vmatpush1.msra.mxu0 0.0
        %1047 = vmatprep.subr.mxu0 0.0
        %1048 = vmatpush1.msra.mxu0 0.0
        %1049 = vmatprep.subr.mxu0 0.0
        %1050 = vmatpush1.msra.mxu0 0.0
        %1051 = vmatprep.subr.mxu0 0.0
        %1052 = vmatpush1.msra.mxu0 0.0
        %1053 = vmatprep.subr.mxu0 0.0
        %1054 = vmatpush1.msra.mxu0 0.0
        %1055 = vmatprep.subr.mxu0 0.0
        %1056 = vmatpush1.msra.mxu0 0.0
        %1057 = vmatprep.subr.mxu0 0.0
        %1058 = vmatpush1.msra.mxu0 0.0
        %1059 = vmatprep.subr.mxu0 0.0
        %1060 = vmatpush1.msra.mxu0 0.0
        %1061 = vmatprep.mubr.f32.mxu0 0.0
        %1062 = vmatmul.mubr.f32.gmra.mrb[0].mxu0 %v995
        %v1063 = vpop.f32.mrb[0].mxu0
        %v1064 = vadd.f32 0.0, %v1063
        %v1065 = vpop.f32.mrb[0].mxu0
        %1066 = vdwg.mxu0
        %v1067 = vrcp.pop %v765
        %v1068 = vrcp.pop %v768
        %v1069 = vrcp.pop %v771
        %v1070 = vrcp.pop %v774
        %v1071 = vmul.f32 %v845, %v1067
        %v1072 = vmul.f32 %v918, %v1068
        %v1073 = vmul.f32 %v991, %v1069
        %v1074 = vmul.f32 %v1064, %v1070
        %1076 = vrot.lane.b32.xlu0 %v1072, 8
        %v1077 = vpop.permute.xlu0 %1076
        %1080 = vrot.lane.b32.xlu0 %v1073, 16
        %v1081 = vpop.permute.xlu0 %1080
        %1084 = vrot.lane.b32.xlu0 %v1074, 24
        %v1085 = vpop.permute.xlu0 %1084
        %v1087 = vsel %vm423, %v1071, %v1077
        %vm1088 = vcmask 130048
        %v1089 = vsel %vm1088, %v1087, %v1081
        %vm1090 = vcmask 195584
        %v1091 = vsel %vm1090, %v1089, %v1085
        %vm1092 = vcmask 261120
        %1093 = vst.msk [vmem:[%s254] sm:$0xff] %vm1092, %v1091
        %s1094 = sand.u32 %s138, 1
        %s1095 = scalar_lea.sflag [#allocation7], %s1094
        %s1096 = sand.u32 %s138, 1
        %s1097 = smul.addr %s1096, 8
        %s1098 = scalar_lea.vmem [#allocation10], %s1097
        // Predicated region
        $region49: #{tpu_custom_call.1} parent=35 // pred_check
          %p1099 = pneg %p148
        $region50: #{tpu_custom_call.1} parent=35 // pred_check_branch
          %1101 = sbr.rel (%p1099) target = $region52
        $region51: #{tpu_custom_call.1} parent=35 // pred_region
          %s1103 = ssub.s32 128, 128
          %1104 = vsyncadd %s1095, %s1103
          %s1105 = sadd.s32 %s27, %s26
          %s1106 = smul.addr %s1105, 128
          %s1107 = scalar_lea.hbm %s4, %s1106
          %s1109 = sshll.u32 %s1098, 4
          %s1110 = int_to_ptr.vmem [resolvable:$true] %s1109
          %1112 = dma.vmem_to_hbm [thread:$0]  %s1110, 128, %s1107, %s1095
        $region52: #{tpu_custom_call.1} parent=35 // pred_fallthru
          _
      $region36: #{tpu_custom_call.1} parent=5 // pred_fallthru
        _
      %p1113 = scmp.le.s32.totalorder 2, %s17
      // Predicated region
      $region53: #{tpu_custom_call.1} parent=5 // pred_check
        %p1114 = pneg %p1113
      $region54: #{tpu_custom_call.1} parent=5 // pred_check_branch
        %1116 = sbr.rel (%p1114) target = $region56
      $region55: #{tpu_custom_call.1} parent=5 // pred_region
        %s1117 = ssub.s32 %s17, 2
        // Predicated region
        $region57: #{tpu_custom_call.1} parent=55 // pred_check
          %p1118 = pneg %p154
        $region58: #{tpu_custom_call.1} parent=55 // pred_check_branch
          %1120 = sbr.rel (%p1118) target = $region60
        $region59: #{tpu_custom_call.1} parent=55 // pred_region
          %s1121 = sand.u32 %s139, 1
          %s1122 = scalar_lea.sflag [#allocation7], %s1121
          %s1123 = sand.u32 %s139, 1
          %s1124 = smul.addr %s1123, 8
          %s1125 = scalar_lea.vmem [#allocation10], %s1124
          %1126 = dma.done %s1122, 128
        $region60: #{tpu_custom_call.1} parent=55 // pred_fallthru
          _
      $region56: #{tpu_custom_call.1} parent=5 // pred_fallthru
        _
    $region6: #{tpu_custom_call.1} parent=1 // loop_footer
      %s21 = sadd.s32 1, %s17
    $region7: #{tpu_custom_call.1} parent=1 // loop_footer_branch
      %16 = sbr.rel target = $region3
    $region8: #{tpu_custom_call.1} parent=1 // loop_exit
      _
    %1127 = vsyncpa [#allocation6], 1
    %s1128 = scalar_lea.sflag [#allocation6], 1
    %1129 = vsyncpa %s1128, 1
    %1130 = vsyncpa [#allocation9], 1
    %1131 = vsyncpa [#allocation7], 1
    %s1132 = scalar_lea.sflag [#allocation7], 1
    %1133 = vsyncpa %s1132, 1

</llo_original>
